<compile_context>
chip_gen: v5e
topology: v5e:2x2
jax: 0.10.0
libtpu: 0.0.40
codegen_flags: <defaults>
</compile_context>

<pallas_src>
import functools
import math

import numpy as np
import jax
import jax.numpy as jnp
from jax.experimental import pallas as pl
from jax.experimental.pallas import tpu as pltpu

# ---------------- scaled-down BERT config (synthetic, deterministic) --------
VOCAB = 50
TYPE_VOCAB = 2
MAX_POS = 16
HIDDEN = 32          # stands in for 768
N_HEADS = 4
HEAD_DIM = HIDDEN // N_HEADS
N_LAYERS = 2
INTERMEDIATE = 64
LABEL_SIZE = 5       # label_encoder.label_size
LN_EPS = 1e-12
LANE = 128           # TPU lane width

# Combined embedding-table row layout: [word | position | token-type],
# each segment padded up to a sublane multiple so the offsets stay 8-aligned.
VOCAB_PAD = 56
TYPE_PAD = 8
OFF_POS = VOCAB_PAD
OFF_TYPE = VOCAB_PAD + MAX_POS
EMB_ROWS = VOCAB_PAD + MAX_POS + TYPE_PAD      # 80


# ----------------------------- in-kernel helpers -----------------------------
def _gelu_tanh(x):
    # TODO(synk): HF BertIntermediate defaults to exact erf-GELU; the tanh
    # approximation differs at the ~1e-3 level.
    return 0.5 * x * (1.0 + jnp.tanh(0.7978845608028654 * (x + 0.044715 * x * x * x)))


def _layernorm(x, g, b):
    mean = jnp.mean(x, axis=-1, keepdims=True)
    var = jnp.mean((x - mean) ** 2, axis=-1, keepdims=True)
    return (x - mean) * jax.lax.rsqrt(var + LN_EPS) * g + b


def _full_spec(shape):
    # Whole-array block; total footprint here is << VMEM, everything resident.
    return pl.BlockSpec(shape, lambda i: (0,) * len(shape))


# ----------------------------- fused forward kernel --------------------------
def _bert_forward_kernel(*refs, batch, seq, n_heads, head_dim, hidden, n_layers):
    (ids_ref, tids_ref, pids_ref, emb_ref, embg_ref, embb_ref) = refs[:6]
    layer_refs = refs[6:6 + 12 * n_layers]
    densew_ref, denseb_ref, out_ref = refs[6 + 12 * n_layers:]

    m = batch * seq

    # --- embeddings: one one-hot matmul against the combined table, then LN --
    # Each row of the one-hot has exactly three ones (word id, position id,
    # token-type id offsets into the combined table), so a single
    # [M, EMB_ROWS] x [EMB_ROWS, H] MXU matmul yields word+pos+type directly.
    col = jax.lax.broadcasted_iota(jnp.int32, (m, EMB_ROWS), 1)
    sel = ((col == ids_ref[...])
           | (col == pids_ref[...] + OFF_POS)
           | (col == tids_ref[...] + OFF_TYPE))
    onehot = jnp.where(sel, jnp.float32(1.0), jnp.float32(0.0))
    h = jnp.dot(onehot, emb_ref[...], preferred_element_type=jnp.float32)
    h = _layernorm(h, embg_ref[...], embb_ref[...])

    scale = 1.0 / math.sqrt(head_dim)

    # --- transformer encoder layers (unrolled at trace time) -----------------
    for l in range(n_layers):
        (wqkv_ref, bqkv_ref, wo_ref, bo_ref, ln1g_ref, ln1b_ref,
         w1_ref, b1_ref, w2_ref, b2_ref, ln2g_ref, ln2b_ref) = \
            layer_refs[l * 12:(l + 1) * 12]

        # Fused QKV projection: one [M, H] x [H, 3H] bf16 MXU matmul.
        qkv = jnp.dot(h.astype(jnp.bfloat16), wqkv_ref[...],
                      preferred_element_type=jnp.float32) + bqkv_ref[...]

        # Multi-head self-attention. Head splits are static lane slices; the
        # per-head contexts are concatenated so the output projection is a
        # SINGLE [M, H] x [H, H] matmul instead of n_heads tiny K=head_dim
        # matmuls into Wo slices.  No attention mask (HF BertModel defaults
        # attention_mask to all ones).
        ctx_heads = []
        for hd in range(n_heads):
            lo = hd * head_dim
            q = (qkv[:, lo:lo + head_dim] * scale).reshape(batch, seq, head_dim)
            k = qkv[:, hidden + lo:hidden + lo + head_dim].reshape(batch, seq, head_dim)
            v = qkv[:, 2 * hidden + lo:2 * hidden + lo + head_dim].reshape(batch, seq, head_dim)
            s = jnp.einsum("bqd,bkd->bqk", q, k, preferred_element_type=jnp.float32)
            s = s - jnp.max(s, axis=-1, keepdims=True)
            p = jnp.exp(s)
            p = p * pl.reciprocal(jnp.sum(p, axis=-1, keepdims=True), approx=True)
            c = jnp.einsum("bqk,bkd->bqd", p, v, preferred_element_type=jnp.float32)
            ctx_heads.append(c.reshape(m, head_dim))
        ctx = jnp.concatenate(ctx_heads, axis=-1)                       # [M, H]
        attn_out = jnp.dot(ctx.astype(jnp.bfloat16), wo_ref[...],
                           preferred_element_type=jnp.float32) + bo_ref[...]

        # Residual + LayerNorm 1 (elementwise kept in f32; v5e has no bf16 VPU/EUP).
        h1 = _layernorm(attn_out + h, ln1g_ref[...], ln1b_ref[...])

        # Feed-forward: W1 + GELU + W2; intermediate stays in vregs/VMEM.
        ffn = jnp.dot(h1.astype(jnp.bfloat16), w1_ref[...],
                      preferred_element_type=jnp.float32) + b1_ref[...]
        ffn = _gelu_tanh(ffn)
        ffn = jnp.dot(ffn.astype(jnp.bfloat16), w2_ref[...],
                      preferred_element_type=jnp.float32) + b2_ref[...]

        # Residual + LayerNorm 2
        h = _layernorm(ffn + h1, ln2g_ref[...], ln2b_ref[...])

    # --- classifier: lane-dense (pre-padded 128-wide) output block -----------
    logits = jnp.dot(h.astype(jnp.bfloat16), densew_ref[...],
                     preferred_element_type=jnp.float32) + denseb_ref[...]
    out_ref[...] = logits.astype(out_ref.dtype)


# --------------------------- parameter initialization -----------------------
def init_params(key):
    keys = iter(jax.random.split(key, 4 + N_LAYERS * 6))

    def nrm(shape):
        return jax.random.normal(next(keys), shape, jnp.float32) * 0.02

    # Combined embedding table: rows [0,VOCAB) word ids, [OFF_POS,..) positions,
    # [OFF_TYPE,..) token types; padding rows stay zero (never selected).
    emb_table = jnp.zeros((EMB_ROWS, HIDDEN), jnp.float32)
    emb_table = emb_table.at[:VOCAB].set(nrm((VOCAB, HIDDEN)))
    emb_table = emb_table.at[OFF_POS:OFF_POS + MAX_POS].set(nrm((MAX_POS, HIDDEN)))
    emb_table = emb_table.at[OFF_TYPE:OFF_TYPE + TYPE_VOCAB].set(nrm((TYPE_VOCAB, HIDDEN)))

    # Classifier weight/bias pre-padded to the 128-lane output block (one-time,
    # outside the jitted forward; no per-call jnp.pad).
    dense_w = jnp.zeros((HIDDEN, LANE), jnp.float32)
    dense_w = dense_w.at[:, :LABEL_SIZE].set(nrm((HIDDEN, LABEL_SIZE))).astype(jnp.bfloat16)

    params = {
        "emb_table": emb_table,
        "emb_ln_g": jnp.ones((1, HIDDEN), jnp.float32),
        "emb_ln_b": jnp.zeros((1, HIDDEN), jnp.float32),
        "dense_w": dense_w,                              # [H, 128] bf16, pre-padded
        "dense_b": jnp.zeros((1, LANE), jnp.float32),
        "layers": [],
    }
    for _ in range(N_LAYERS):
        wq, wk, wv = (nrm((HIDDEN, HIDDEN)) for _ in range(3))
        params["layers"].append({
            # Q/K/V fused into one [H, 3H] bf16 weight (single MXU push).
            "wqkv": jnp.concatenate([wq, wk, wv], axis=1).astype(jnp.bfloat16),
            "bqkv": jnp.zeros((1, 3 * HIDDEN), jnp.float32),
            "wo": nrm((HIDDEN, HIDDEN)).astype(jnp.bfloat16),
            "bo": jnp.zeros((1, HIDDEN), jnp.float32),
            "ln1_g": jnp.ones((1, HIDDEN), jnp.float32),
            "ln1_b": jnp.zeros((1, HIDDEN), jnp.float32),
            "w1": nrm((HIDDEN, INTERMEDIATE)).astype(jnp.bfloat16),
            "b1": jnp.zeros((1, INTERMEDIATE), jnp.float32),
            "w2": nrm((INTERMEDIATE, HIDDEN)).astype(jnp.bfloat16),
            "b2": jnp.zeros((1, HIDDEN), jnp.float32),
            "ln2_g": jnp.ones((1, HIDDEN), jnp.float32),
            "ln2_b": jnp.zeros((1, HIDDEN), jnp.float32),
        })
    return params


# ------------------------------- forward pass --------------------------------
def bert_softmax_forward(params, input_ids, token_type_ids):
    B, S = input_ids.shape
    M = B * S

    # 2-D id columns for the in-kernel one-hot build; position ids are a
    # compile-time constant (no runtime gather / tile ops in the wrapper).
    ids = input_ids.reshape(M, 1).astype(jnp.int32)
    tids = token_type_ids.reshape(M, 1).astype(jnp.int32)
    pids = jnp.asarray(np.arange(M, dtype=np.int32) % S).reshape(M, 1)

    layer_args = []
    for lp in params["layers"]:
        layer_args += [lp["wqkv"], lp["bqkv"], lp["wo"], lp["bo"],
                       lp["ln1_g"], lp["ln1_b"], lp["w1"], lp["b1"],
                       lp["w2"], lp["b2"], lp["ln2_g"], lp["ln2_b"]]

    args = [ids, tids, pids, params["emb_table"],
            params["emb_ln_g"], params["emb_ln_b"],
            *layer_args, params["dense_w"], params["dense_b"]]

    kernel = functools.partial(
        _bert_forward_kernel, batch=B, seq=S, n_heads=N_HEADS,
        head_dim=HEAD_DIM, hidden=HIDDEN, n_layers=N_LAYERS)

    # Single fused pallas_call for the whole forward; grid=(1,) (no benefit in
    # sharding across cores at M=16 — see review: keep one TC busy).
    out = pl.pallas_call(
        kernel,
        out_shape=jax.ShapeDtypeStruct((M, LANE), jnp.float32),
        grid=(1,),
        in_specs=[_full_spec(a.shape) for a in args],
        out_specs=_full_spec((M, LANE)),
        compiler_params=pltpu.CompilerParams(dimension_semantics=("arbitrary",)),
    )(*args)

    # sequence_output -> self.dense -> score.view(B*S, label_size)
    # (pooled_output is unused; self.pooled == False; raw logits returned.)
    return out[:, :LABEL_SIZE]

# TODO(synk): WhitespaceTokenizer, pretrained-checkpoint loading, dropout
# (unused in forward) and optimizer parameter grouping have no Pallas
# equivalent (host-side / training-only).


if __name__ == "__main__":
    key = jax.random.PRNGKey(0)
    pkey, ikey, tkey = jax.random.split(key, 3)
    params = init_params(pkey)

    B, S = 2, 8
    input_ids = jax.random.randint(ikey, (B, S), 0, VOCAB, dtype=jnp.int32)
    token_type_ids = jax.random.randint(tkey, (B, S), 0, TYPE_VOCAB, dtype=jnp.int32)

    score = jax.jit(bert_softmax_forward)(params, input_ids, token_type_ids)
    jax.block_until_ready(score)

    assert score.shape == (B * S, LABEL_SIZE), score.shape
    assert score.dtype == jnp.float32
    print("KERNEL_OK")
</pallas_src>

<mosaic_0001>
module attributes {stable_mosaic.version = 11 : i64} {
  func.func @_bert_forward_kernel(%arg0: i32, %arg1: memref<16x1xi32, #tpu.memory_space<vmem>>, %arg2: memref<16x1xi32, #tpu.memory_space<vmem>>, %arg3: memref<16x1xi32, #tpu.memory_space<vmem>>, %arg4: memref<80x32xf32, #tpu.memory_space<vmem>>, %arg5: memref<1x32xf32, #tpu.memory_space<vmem>>, %arg6: memref<1x32xf32, #tpu.memory_space<vmem>>, %arg7: memref<32x96xbf16, #tpu.memory_space<vmem>>, %arg8: memref<1x96xf32, #tpu.memory_space<vmem>>, %arg9: memref<32x32xbf16, #tpu.memory_space<vmem>>, %arg10: memref<1x32xf32, #tpu.memory_space<vmem>>, %arg11: memref<1x32xf32, #tpu.memory_space<vmem>>, %arg12: memref<1x32xf32, #tpu.memory_space<vmem>>, %arg13: memref<32x64xbf16, #tpu.memory_space<vmem>>, %arg14: memref<1x64xf32, #tpu.memory_space<vmem>>, %arg15: memref<64x32xbf16, #tpu.memory_space<vmem>>, %arg16: memref<1x32xf32, #tpu.memory_space<vmem>>, %arg17: memref<1x32xf32, #tpu.memory_space<vmem>>, %arg18: memref<1x32xf32, #tpu.memory_space<vmem>>, %arg19: memref<32x96xbf16, #tpu.memory_space<vmem>>, %arg20: memref<1x96xf32, #tpu.memory_space<vmem>>, %arg21: memref<32x32xbf16, #tpu.memory_space<vmem>>, %arg22: memref<1x32xf32, #tpu.memory_space<vmem>>, %arg23: memref<1x32xf32, #tpu.memory_space<vmem>>, %arg24: memref<1x32xf32, #tpu.memory_space<vmem>>, %arg25: memref<32x64xbf16, #tpu.memory_space<vmem>>, %arg26: memref<1x64xf32, #tpu.memory_space<vmem>>, %arg27: memref<64x32xbf16, #tpu.memory_space<vmem>>, %arg28: memref<1x32xf32, #tpu.memory_space<vmem>>, %arg29: memref<1x32xf32, #tpu.memory_space<vmem>>, %arg30: memref<1x32xf32, #tpu.memory_space<vmem>>, %arg31: memref<32x128xbf16, #tpu.memory_space<vmem>>, %arg32: memref<1x128xf32, #tpu.memory_space<vmem>>, %arg33: memref<16x128xf32, #tpu.memory_space<vmem>>) attributes {dimension_semantics = [#tpu.dimension_semantics<arbitrary>], iteration_bounds = array<i64: 1>, scalar_prefetch = 0 : i64, scratch_operands = 0 : i64, tpu.core_type = #tpu.core_type<tc>, window_params = [{pipeline_mode = #tpu.pipeline_mode<synchronous>, transform_indices = @transform_0, window_bounds = array<i64: 16, 1>}, {pipeline_mode = #tpu.pipeline_mode<synchronous>, transform_indices = @transform_1, window_bounds = array<i64: 16, 1>}, {pipeline_mode = #tpu.pipeline_mode<synchronous>, transform_indices = @transform_2, window_bounds = array<i64: 16, 1>}, {pipeline_mode = #tpu.pipeline_mode<synchronous>, transform_indices = @transform_3, window_bounds = array<i64: 80, 32>}, {pipeline_mode = #tpu.pipeline_mode<synchronous>, transform_indices = @transform_4, window_bounds = array<i64: 1, 32>}, {pipeline_mode = #tpu.pipeline_mode<synchronous>, transform_indices = @transform_5, window_bounds = array<i64: 1, 32>}, {pipeline_mode = #tpu.pipeline_mode<synchronous>, transform_indices = @transform_6, window_bounds = array<i64: 32, 96>}, {pipeline_mode = #tpu.pipeline_mode<synchronous>, transform_indices = @transform_7, window_bounds = array<i64: 1, 96>}, {pipeline_mode = #tpu.pipeline_mode<synchronous>, transform_indices = @transform_8, window_bounds = array<i64: 32, 32>}, {pipeline_mode = #tpu.pipeline_mode<synchronous>, transform_indices = @transform_9, window_bounds = array<i64: 1, 32>}, {pipeline_mode = #tpu.pipeline_mode<synchronous>, transform_indices = @transform_10, window_bounds = array<i64: 1, 32>}, {pipeline_mode = #tpu.pipeline_mode<synchronous>, transform_indices = @transform_11, window_bounds = array<i64: 1, 32>}, {pipeline_mode = #tpu.pipeline_mode<synchronous>, transform_indices = @transform_12, window_bounds = array<i64: 32, 64>}, {pipeline_mode = #tpu.pipeline_mode<synchronous>, transform_indices = @transform_13, window_bounds = array<i64: 1, 64>}, {pipeline_mode = #tpu.pipeline_mode<synchronous>, transform_indices = @transform_14, window_bounds = array<i64: 64, 32>}, {pipeline_mode = #tpu.pipeline_mode<synchronous>, transform_indices = @transform_15, window_bounds = array<i64: 1, 32>}, {pipeline_mode = #tpu.pipeline_mode<synchronous>, transform_indices = @transform_16, window_bounds = array<i64: 1, 32>}, {pipeline_mode = #tpu.pipeline_mode<synchronous>, transform_indices = @transform_17, window_bounds = array<i64: 1, 32>}, {pipeline_mode = #tpu.pipeline_mode<synchronous>, transform_indices = @transform_18, window_bounds = array<i64: 32, 96>}, {pipeline_mode = #tpu.pipeline_mode<synchronous>, transform_indices = @transform_19, window_bounds = array<i64: 1, 96>}, {pipeline_mode = #tpu.pipeline_mode<synchronous>, transform_indices = @transform_20, window_bounds = array<i64: 32, 32>}, {pipeline_mode = #tpu.pipeline_mode<synchronous>, transform_indices = @transform_21, window_bounds = array<i64: 1, 32>}, {pipeline_mode = #tpu.pipeline_mode<synchronous>, transform_indices = @transform_22, window_bounds = array<i64: 1, 32>}, {pipeline_mode = #tpu.pipeline_mode<synchronous>, transform_indices = @transform_23, window_bounds = array<i64: 1, 32>}, {pipeline_mode = #tpu.pipeline_mode<synchronous>, transform_indices = @transform_24, window_bounds = array<i64: 32, 64>}, {pipeline_mode = #tpu.pipeline_mode<synchronous>, transform_indices = @transform_25, window_bounds = array<i64: 1, 64>}, {pipeline_mode = #tpu.pipeline_mode<synchronous>, transform_indices = @transform_26, window_bounds = array<i64: 64, 32>}, {pipeline_mode = #tpu.pipeline_mode<synchronous>, transform_indices = @transform_27, window_bounds = array<i64: 1, 32>}, {pipeline_mode = #tpu.pipeline_mode<synchronous>, transform_indices = @transform_28, window_bounds = array<i64: 1, 32>}, {pipeline_mode = #tpu.pipeline_mode<synchronous>, transform_indices = @transform_29, window_bounds = array<i64: 1, 32>}, {pipeline_mode = #tpu.pipeline_mode<synchronous>, transform_indices = @transform_30, window_bounds = array<i64: 32, 128>}, {pipeline_mode = #tpu.pipeline_mode<synchronous>, transform_indices = @transform_31, window_bounds = array<i64: 1, 128>}, {pipeline_mode = #tpu.pipeline_mode<synchronous>, transform_indices = @transform_32, window_bounds = array<i64: 16, 128>}]} {
    %0 = tpu.iota {dimensions = array<i32: 1>} : vector<16x80xi32>
    %c0 = arith.constant 0 : index
    %c0_0 = arith.constant 0 : index
    %1 = vector.load %arg1[%c0, %c0_0] : memref<16x1xi32, #tpu.memory_space<vmem>>, vector<16x1xi32>
    %2 = vector.broadcast %1 : vector<16x1xi32> to vector<16x80xi32>
    %3 = arith.cmpi eq, %0, %2 : vector<16x80xi32>
    %c0_1 = arith.constant 0 : index
    %c0_2 = arith.constant 0 : index
    %4 = vector.load %arg3[%c0_1, %c0_2] : memref<16x1xi32, #tpu.memory_space<vmem>>, vector<16x1xi32>
    %c56_i32 = arith.constant 56 : i32
    %5 = vector.broadcast %c56_i32 : i32 to vector<16x1xi32>
    %6 = arith.addi %4, %5 : vector<16x1xi32>
    %7 = vector.broadcast %6 : vector<16x1xi32> to vector<16x80xi32>
    %8 = arith.cmpi eq, %0, %7 : vector<16x80xi32>
    %9 = arith.ori %3, %8 : vector<16x80xi1>
    %c0_3 = arith.constant 0 : index
    %c0_4 = arith.constant 0 : index
    %10 = vector.load %arg2[%c0_3, %c0_4] : memref<16x1xi32, #tpu.memory_space<vmem>>, vector<16x1xi32>
    %c72_i32 = arith.constant 72 : i32
    %11 = vector.broadcast %c72_i32 : i32 to vector<16x1xi32>
    %12 = arith.addi %10, %11 : vector<16x1xi32>
    %13 = vector.broadcast %12 : vector<16x1xi32> to vector<16x80xi32>
    %14 = arith.cmpi eq, %0, %13 : vector<16x80xi32>
    %15 = arith.ori %9, %14 : vector<16x80xi1>
    %cst = arith.constant 1.000000e+00 : f32
    %cst_5 = arith.constant 0.000000e+00 : f32
    %16 = vector.broadcast %cst : f32 to vector<16x80xf32>
    %17 = vector.broadcast %cst_5 : f32 to vector<16x80xf32>
    %18 = arith.select %15, %16, %17 : vector<16x80xi1>, vector<16x80xf32>
    %c0_6 = arith.constant 0 : index
    %c0_7 = arith.constant 0 : index
    %19 = vector.load %arg4[%c0_6, %c0_7] : memref<80x32xf32, #tpu.memory_space<vmem>>, vector<80x32xf32>
    %cst_8 = arith.constant dense<0.000000e+00> : vector<16x32xf32>
    %20 = tpu.matmul %18, %19, %cst_8 {dimension_numbers = #tpu.dot_dimension_numbers<[1], [0], [0], [1], [0, 0, 1, 1], [], []>} : vector<16x80xf32>, vector<80x32xf32>, vector<16x32xf32> -> vector<16x32xf32>
    %c0_9 = arith.constant 0 : index
    %c0_10 = arith.constant 0 : index
    %21 = vector.load %arg5[%c0_9, %c0_10] : memref<1x32xf32, #tpu.memory_space<vmem>>, vector<1x32xf32>
    %c0_11 = arith.constant 0 : index
    %c0_12 = arith.constant 0 : index
    %22 = vector.load %arg6[%c0_11, %c0_12] : memref<1x32xf32, #tpu.memory_space<vmem>>, vector<1x32xf32>
    %cst_13 = arith.constant dense<0.000000e+00> : vector<16xf32>
    %23 = vector.multi_reduction <add>, %20, %cst_13 [1] : vector<16x32xf32> to vector<16xf32>
    %24 = vector.shape_cast %23 : vector<16xf32> to vector<16x1xf32>
    %cst_14 = arith.constant 3.200000e+01 : f32
    %25 = vector.broadcast %cst_14 : f32 to vector<16x1xf32>
    %26 = arith.divf %24, %25 : vector<16x1xf32>
    %27 = vector.broadcast %26 : vector<16x1xf32> to vector<16x32xf32>
    %28 = arith.subf %20, %27 : vector<16x32xf32>
    %29 = arith.mulf %28, %28 : vector<16x32xf32>
    %cst_15 = arith.constant dense<0.000000e+00> : vector<16xf32>
    %30 = vector.multi_reduction <add>, %29, %cst_15 [1] : vector<16x32xf32> to vector<16xf32>
    %31 = vector.shape_cast %30 : vector<16xf32> to vector<16x1xf32>
    %cst_16 = arith.constant 3.200000e+01 : f32
    %32 = vector.broadcast %cst_16 : f32 to vector<16x1xf32>
    %33 = arith.divf %31, %32 : vector<16x1xf32>
    %34 = vector.broadcast %26 : vector<16x1xf32> to vector<16x32xf32>
    %35 = arith.subf %20, %34 : vector<16x32xf32>
    %cst_17 = arith.constant 9.99999996E-13 : f32
    %36 = vector.broadcast %cst_17 : f32 to vector<16x1xf32>
    %37 = arith.addf %33, %36 : vector<16x1xf32>
    %38 = math.rsqrt %37 : vector<16x1xf32>
    %39 = vector.broadcast %38 : vector<16x1xf32> to vector<16x32xf32>
    %40 = arith.mulf %35, %39 : vector<16x32xf32>
    %41 = vector.broadcast %21 : vector<1x32xf32> to vector<16x32xf32>
    %42 = arith.mulf %40, %41 : vector<16x32xf32>
    %43 = vector.broadcast %22 : vector<1x32xf32> to vector<16x32xf32>
    %44 = arith.addf %42, %43 : vector<16x32xf32>
    %45 = arith.truncf %44 : vector<16x32xf32> to vector<16x32xbf16>
    %c0_18 = arith.constant 0 : index
    %c0_19 = arith.constant 0 : index
    %46 = vector.load %arg7[%c0_18, %c0_19] : memref<32x96xbf16, #tpu.memory_space<vmem>>, vector<32x96xbf16>
    %cst_20 = arith.constant dense<0.000000e+00> : vector<16x96xf32>
    %47 = tpu.matmul %45, %46, %cst_20 {dimension_numbers = #tpu.dot_dimension_numbers<[1], [0], [0], [1], [0, 0, 1, 1], [], []>} : vector<16x32xbf16>, vector<32x96xbf16>, vector<16x96xf32> -> vector<16x96xf32>
    %c0_21 = arith.constant 0 : index
    %c0_22 = arith.constant 0 : index
    %48 = vector.load %arg8[%c0_21, %c0_22] : memref<1x96xf32, #tpu.memory_space<vmem>>, vector<1x96xf32>
    %49 = vector.broadcast %48 : vector<1x96xf32> to vector<16x96xf32>
    %50 = arith.addf %47, %49 : vector<16x96xf32>
    %51 = vector.extract_strided_slice %50 {offsets = [0, 0], sizes = [16, 8], strides = [1, 1]} : vector<16x96xf32> to vector<16x8xf32>
    %cst_23 = arith.constant 0.353553385 : f32
    %52 = vector.broadcast %cst_23 : f32 to vector<16x8xf32>
    %53 = arith.mulf %51, %52 : vector<16x8xf32>
    %54 = vector.shape_cast %53 : vector<16x8xf32> to vector<2x8x8xf32>
    %55 = vector.extract_strided_slice %50 {offsets = [0, 32], sizes = [16, 8], strides = [1, 1]} : vector<16x96xf32> to vector<16x8xf32>
    %56 = vector.shape_cast %55 : vector<16x8xf32> to vector<2x8x8xf32>
    %57 = vector.extract_strided_slice %50 {offsets = [0, 64], sizes = [16, 8], strides = [1, 1]} : vector<16x96xf32> to vector<16x8xf32>
    %58 = vector.shape_cast %57 : vector<16x8xf32> to vector<2x8x8xf32>
    "tpu.trace_start"() <{level = 10 : i32, message = "bqd,bkd->bqk"}> : () -> ()
    %cst_24 = arith.constant dense<0.000000e+00> : vector<2x8x8xf32>
    %59 = tpu.matmul %54, %56, %cst_24 {dimension_numbers = #tpu.dot_dimension_numbers<[2], [2], [1], [1], [0, 0, 0, 1, 1, 1], [0], [0]>} : vector<2x8x8xf32>, vector<2x8x8xf32>, vector<2x8x8xf32> -> vector<2x8x8xf32>
    "tpu.trace_stop"() : () -> ()
    %cst_25 = arith.constant dense<0xFF800000> : vector<2x8xf32>
    %60 = vector.multi_reduction <maximumf>, %59, %cst_25 [2] : vector<2x8x8xf32> to vector<2x8xf32>
    %61 = vector.shape_cast %60 : vector<2x8xf32> to vector<2x8x1xf32>
    %62 = vector.broadcast %61 : vector<2x8x1xf32> to vector<2x8x8xf32>
    %63 = arith.subf %59, %62 : vector<2x8x8xf32>
    %64 = math.exp %63 : vector<2x8x8xf32>
    %cst_26 = arith.constant dense<0.000000e+00> : vector<2x8xf32>
    %65 = vector.multi_reduction <add>, %64, %cst_26 [2] : vector<2x8x8xf32> to vector<2x8xf32>
    %66 = vector.shape_cast %65 : vector<2x8xf32> to vector<2x8x1xf32>
    %67 = tpu.reciprocal %66 {approx = true} : vector<2x8x1xf32> -> vector<2x8x1xf32>
    %68 = vector.broadcast %67 : vector<2x8x1xf32> to vector<2x8x8xf32>
    %69 = arith.mulf %64, %68 : vector<2x8x8xf32>
    "tpu.trace_start"() <{level = 10 : i32, message = "bqk,bkd->bqd"}> : () -> ()
    %cst_27 = arith.constant dense<0.000000e+00> : vector<2x8x8xf32>
    %70 = tpu.matmul %69, %58, %cst_27 {dimension_numbers = #tpu.dot_dimension_numbers<[2], [1], [1], [2], [0, 0, 0, 1, 1, 2], [0], [0]>} : vector<2x8x8xf32>, vector<2x8x8xf32>, vector<2x8x8xf32> -> vector<2x8x8xf32>
    "tpu.trace_stop"() : () -> ()
    %71 = vector.shape_cast %70 : vector<2x8x8xf32> to vector<16x8xf32>
    %72 = vector.extract_strided_slice %50 {offsets = [0, 8], sizes = [16, 8], strides = [1, 1]} : vector<16x96xf32> to vector<16x8xf32>
    %cst_28 = arith.constant 0.353553385 : f32
    %73 = vector.broadcast %cst_28 : f32 to vector<16x8xf32>
    %74 = arith.mulf %72, %73 : vector<16x8xf32>
    %75 = vector.shape_cast %74 : vector<16x8xf32> to vector<2x8x8xf32>
    %76 = vector.extract_strided_slice %50 {offsets = [0, 40], sizes = [16, 8], strides = [1, 1]} : vector<16x96xf32> to vector<16x8xf32>
    %77 = vector.shape_cast %76 : vector<16x8xf32> to vector<2x8x8xf32>
    %78 = vector.extract_strided_slice %50 {offsets = [0, 72], sizes = [16, 8], strides = [1, 1]} : vector<16x96xf32> to vector<16x8xf32>
    %79 = vector.shape_cast %78 : vector<16x8xf32> to vector<2x8x8xf32>
    "tpu.trace_start"() <{level = 10 : i32, message = "bqd,bkd->bqk"}> : () -> ()
    %cst_29 = arith.constant dense<0.000000e+00> : vector<2x8x8xf32>
    %80 = tpu.matmul %75, %77, %cst_29 {dimension_numbers = #tpu.dot_dimension_numbers<[2], [2], [1], [1], [0, 0, 0, 1, 1, 1], [0], [0]>} : vector<2x8x8xf32>, vector<2x8x8xf32>, vector<2x8x8xf32> -> vector<2x8x8xf32>
    "tpu.trace_stop"() : () -> ()
    %cst_30 = arith.constant dense<0xFF800000> : vector<2x8xf32>
    %81 = vector.multi_reduction <maximumf>, %80, %cst_30 [2] : vector<2x8x8xf32> to vector<2x8xf32>
    %82 = vector.shape_cast %81 : vector<2x8xf32> to vector<2x8x1xf32>
    %83 = vector.broadcast %82 : vector<2x8x1xf32> to vector<2x8x8xf32>
    %84 = arith.subf %80, %83 : vector<2x8x8xf32>
    %85 = math.exp %84 : vector<2x8x8xf32>
    %cst_31 = arith.constant dense<0.000000e+00> : vector<2x8xf32>
    %86 = vector.multi_reduction <add>, %85, %cst_31 [2] : vector<2x8x8xf32> to vector<2x8xf32>
    %87 = vector.shape_cast %86 : vector<2x8xf32> to vector<2x8x1xf32>
    %88 = tpu.reciprocal %87 {approx = true} : vector<2x8x1xf32> -> vector<2x8x1xf32>
    %89 = vector.broadcast %88 : vector<2x8x1xf32> to vector<2x8x8xf32>
    %90 = arith.mulf %85, %89 : vector<2x8x8xf32>
    "tpu.trace_start"() <{level = 10 : i32, message = "bqk,bkd->bqd"}> : () -> ()
    %cst_32 = arith.constant dense<0.000000e+00> : vector<2x8x8xf32>
    %91 = tpu.matmul %90, %79, %cst_32 {dimension_numbers = #tpu.dot_dimension_numbers<[2], [1], [1], [2], [0, 0, 0, 1, 1, 2], [0], [0]>} : vector<2x8x8xf32>, vector<2x8x8xf32>, vector<2x8x8xf32> -> vector<2x8x8xf32>
    "tpu.trace_stop"() : () -> ()
    %92 = vector.shape_cast %91 : vector<2x8x8xf32> to vector<16x8xf32>
    %93 = vector.extract_strided_slice %50 {offsets = [0, 16], sizes = [16, 8], strides = [1, 1]} : vector<16x96xf32> to vector<16x8xf32>
    %cst_33 = arith.constant 0.353553385 : f32
    %94 = vector.broadcast %cst_33 : f32 to vector<16x8xf32>
    %95 = arith.mulf %93, %94 : vector<16x8xf32>
    %96 = vector.shape_cast %95 : vector<16x8xf32> to vector<2x8x8xf32>
    %97 = vector.extract_strided_slice %50 {offsets = [0, 48], sizes = [16, 8], strides = [1, 1]} : vector<16x96xf32> to vector<16x8xf32>
    %98 = vector.shape_cast %97 : vector<16x8xf32> to vector<2x8x8xf32>
    %99 = vector.extract_strided_slice %50 {offsets = [0, 80], sizes = [16, 8], strides = [1, 1]} : vector<16x96xf32> to vector<16x8xf32>
    %100 = vector.shape_cast %99 : vector<16x8xf32> to vector<2x8x8xf32>
    "tpu.trace_start"() <{level = 10 : i32, message = "bqd,bkd->bqk"}> : () -> ()
    %cst_34 = arith.constant dense<0.000000e+00> : vector<2x8x8xf32>
    %101 = tpu.matmul %96, %98, %cst_34 {dimension_numbers = #tpu.dot_dimension_numbers<[2], [2], [1], [1], [0, 0, 0, 1, 1, 1], [0], [0]>} : vector<2x8x8xf32>, vector<2x8x8xf32>, vector<2x8x8xf32> -> vector<2x8x8xf32>
    "tpu.trace_stop"() : () -> ()
    %cst_35 = arith.constant dense<0xFF800000> : vector<2x8xf32>
    %102 = vector.multi_reduction <maximumf>, %101, %cst_35 [2] : vector<2x8x8xf32> to vector<2x8xf32>
    %103 = vector.shape_cast %102 : vector<2x8xf32> to vector<2x8x1xf32>
    %104 = vector.broadcast %103 : vector<2x8x1xf32> to vector<2x8x8xf32>
    %105 = arith.subf %101, %104 : vector<2x8x8xf32>
    %106 = math.exp %105 : vector<2x8x8xf32>
    %cst_36 = arith.constant dense<0.000000e+00> : vector<2x8xf32>
    %107 = vector.multi_reduction <add>, %106, %cst_36 [2] : vector<2x8x8xf32> to vector<2x8xf32>
    %108 = vector.shape_cast %107 : vector<2x8xf32> to vector<2x8x1xf32>
    %109 = tpu.reciprocal %108 {approx = true} : vector<2x8x1xf32> -> vector<2x8x1xf32>
    %110 = vector.broadcast %109 : vector<2x8x1xf32> to vector<2x8x8xf32>
    %111 = arith.mulf %106, %110 : vector<2x8x8xf32>
    "tpu.trace_start"() <{level = 10 : i32, message = "bqk,bkd->bqd"}> : () -> ()
    %cst_37 = arith.constant dense<0.000000e+00> : vector<2x8x8xf32>
    %112 = tpu.matmul %111, %100, %cst_37 {dimension_numbers = #tpu.dot_dimension_numbers<[2], [1], [1], [2], [0, 0, 0, 1, 1, 2], [0], [0]>} : vector<2x8x8xf32>, vector<2x8x8xf32>, vector<2x8x8xf32> -> vector<2x8x8xf32>
    "tpu.trace_stop"() : () -> ()
    %113 = vector.shape_cast %112 : vector<2x8x8xf32> to vector<16x8xf32>
    %114 = vector.extract_strided_slice %50 {offsets = [0, 24], sizes = [16, 8], strides = [1, 1]} : vector<16x96xf32> to vector<16x8xf32>
    %cst_38 = arith.constant 0.353553385 : f32
    %115 = vector.broadcast %cst_38 : f32 to vector<16x8xf32>
    %116 = arith.mulf %114, %115 : vector<16x8xf32>
    %117 = vector.shape_cast %116 : vector<16x8xf32> to vector<2x8x8xf32>
    %118 = vector.extract_strided_slice %50 {offsets = [0, 56], sizes = [16, 8], strides = [1, 1]} : vector<16x96xf32> to vector<16x8xf32>
    %119 = vector.shape_cast %118 : vector<16x8xf32> to vector<2x8x8xf32>
    %120 = vector.extract_strided_slice %50 {offsets = [0, 88], sizes = [16, 8], strides = [1, 1]} : vector<16x96xf32> to vector<16x8xf32>
    %121 = vector.shape_cast %120 : vector<16x8xf32> to vector<2x8x8xf32>
    "tpu.trace_start"() <{level = 10 : i32, message = "bqd,bkd->bqk"}> : () -> ()
    %cst_39 = arith.constant dense<0.000000e+00> : vector<2x8x8xf32>
    %122 = tpu.matmul %117, %119, %cst_39 {dimension_numbers = #tpu.dot_dimension_numbers<[2], [2], [1], [1], [0, 0, 0, 1, 1, 1], [0], [0]>} : vector<2x8x8xf32>, vector<2x8x8xf32>, vector<2x8x8xf32> -> vector<2x8x8xf32>
    "tpu.trace_stop"() : () -> ()
    %cst_40 = arith.constant dense<0xFF800000> : vector<2x8xf32>
    %123 = vector.multi_reduction <maximumf>, %122, %cst_40 [2] : vector<2x8x8xf32> to vector<2x8xf32>
    %124 = vector.shape_cast %123 : vector<2x8xf32> to vector<2x8x1xf32>
    %125 = vector.broadcast %124 : vector<2x8x1xf32> to vector<2x8x8xf32>
    %126 = arith.subf %122, %125 : vector<2x8x8xf32>
    %127 = math.exp %126 : vector<2x8x8xf32>
    %cst_41 = arith.constant dense<0.000000e+00> : vector<2x8xf32>
    %128 = vector.multi_reduction <add>, %127, %cst_41 [2] : vector<2x8x8xf32> to vector<2x8xf32>
    %129 = vector.shape_cast %128 : vector<2x8xf32> to vector<2x8x1xf32>
    %130 = tpu.reciprocal %129 {approx = true} : vector<2x8x1xf32> -> vector<2x8x1xf32>
    %131 = vector.broadcast %130 : vector<2x8x1xf32> to vector<2x8x8xf32>
    %132 = arith.mulf %127, %131 : vector<2x8x8xf32>
    "tpu.trace_start"() <{level = 10 : i32, message = "bqk,bkd->bqd"}> : () -> ()
    %cst_42 = arith.constant dense<0.000000e+00> : vector<2x8x8xf32>
    %133 = tpu.matmul %132, %121, %cst_42 {dimension_numbers = #tpu.dot_dimension_numbers<[2], [1], [1], [2], [0, 0, 0, 1, 1, 2], [0], [0]>} : vector<2x8x8xf32>, vector<2x8x8xf32>, vector<2x8x8xf32> -> vector<2x8x8xf32>
    "tpu.trace_stop"() : () -> ()
    %134 = vector.shape_cast %133 : vector<2x8x8xf32> to vector<16x8xf32>
    %135 = tpu.concatenate %71, %92, %113, %134 in 1 : vector<16x8xf32>, vector<16x8xf32>, vector<16x8xf32>, vector<16x8xf32> -> vector<16x32xf32>
    %136 = arith.truncf %135 : vector<16x32xf32> to vector<16x32xbf16>
    %c0_43 = arith.constant 0 : index
    %c0_44 = arith.constant 0 : index
    %137 = vector.load %arg9[%c0_43, %c0_44] : memref<32x32xbf16, #tpu.memory_space<vmem>>, vector<32x32xbf16>
    %cst_45 = arith.constant dense<0.000000e+00> : vector<16x32xf32>
    %138 = tpu.matmul %136, %137, %cst_45 {dimension_numbers = #tpu.dot_dimension_numbers<[1], [0], [0], [1], [0, 0, 1, 1], [], []>} : vector<16x32xbf16>, vector<32x32xbf16>, vector<16x32xf32> -> vector<16x32xf32>
    %c0_46 = arith.constant 0 : index
    %c0_47 = arith.constant 0 : index
    %139 = vector.load %arg10[%c0_46, %c0_47] : memref<1x32xf32, #tpu.memory_space<vmem>>, vector<1x32xf32>
    %140 = vector.broadcast %139 : vector<1x32xf32> to vector<16x32xf32>
    %141 = arith.addf %138, %140 : vector<16x32xf32>
    %142 = arith.addf %141, %44 : vector<16x32xf32>
    %c0_48 = arith.constant 0 : index
    %c0_49 = arith.constant 0 : index
    %143 = vector.load %arg11[%c0_48, %c0_49] : memref<1x32xf32, #tpu.memory_space<vmem>>, vector<1x32xf32>
    %c0_50 = arith.constant 0 : index
    %c0_51 = arith.constant 0 : index
    %144 = vector.load %arg12[%c0_50, %c0_51] : memref<1x32xf32, #tpu.memory_space<vmem>>, vector<1x32xf32>
    %cst_52 = arith.constant dense<0.000000e+00> : vector<16xf32>
    %145 = vector.multi_reduction <add>, %142, %cst_52 [1] : vector<16x32xf32> to vector<16xf32>
    %146 = vector.shape_cast %145 : vector<16xf32> to vector<16x1xf32>
    %cst_53 = arith.constant 3.200000e+01 : f32
    %147 = vector.broadcast %cst_53 : f32 to vector<16x1xf32>
    %148 = arith.divf %146, %147 : vector<16x1xf32>
    %149 = vector.broadcast %148 : vector<16x1xf32> to vector<16x32xf32>
    %150 = arith.subf %142, %149 : vector<16x32xf32>
    %151 = arith.mulf %150, %150 : vector<16x32xf32>
    %cst_54 = arith.constant dense<0.000000e+00> : vector<16xf32>
    %152 = vector.multi_reduction <add>, %151, %cst_54 [1] : vector<16x32xf32> to vector<16xf32>
    %153 = vector.shape_cast %152 : vector<16xf32> to vector<16x1xf32>
    %cst_55 = arith.constant 3.200000e+01 : f32
    %154 = vector.broadcast %cst_55 : f32 to vector<16x1xf32>
    %155 = arith.divf %153, %154 : vector<16x1xf32>
    %156 = vector.broadcast %148 : vector<16x1xf32> to vector<16x32xf32>
    %157 = arith.subf %142, %156 : vector<16x32xf32>
    %cst_56 = arith.constant 9.99999996E-13 : f32
    %158 = vector.broadcast %cst_56 : f32 to vector<16x1xf32>
    %159 = arith.addf %155, %158 : vector<16x1xf32>
    %160 = math.rsqrt %159 : vector<16x1xf32>
    %161 = vector.broadcast %160 : vector<16x1xf32> to vector<16x32xf32>
    %162 = arith.mulf %157, %161 : vector<16x32xf32>
    %163 = vector.broadcast %143 : vector<1x32xf32> to vector<16x32xf32>
    %164 = arith.mulf %162, %163 : vector<16x32xf32>
    %165 = vector.broadcast %144 : vector<1x32xf32> to vector<16x32xf32>
    %166 = arith.addf %164, %165 : vector<16x32xf32>
    %167 = arith.truncf %166 : vector<16x32xf32> to vector<16x32xbf16>
    %c0_57 = arith.constant 0 : index
    %c0_58 = arith.constant 0 : index
    %168 = vector.load %arg13[%c0_57, %c0_58] : memref<32x64xbf16, #tpu.memory_space<vmem>>, vector<32x64xbf16>
    %cst_59 = arith.constant dense<0.000000e+00> : vector<16x64xf32>
    %169 = tpu.matmul %167, %168, %cst_59 {dimension_numbers = #tpu.dot_dimension_numbers<[1], [0], [0], [1], [0, 0, 1, 1], [], []>} : vector<16x32xbf16>, vector<32x64xbf16>, vector<16x64xf32> -> vector<16x64xf32>
    %c0_60 = arith.constant 0 : index
    %c0_61 = arith.constant 0 : index
    %170 = vector.load %arg14[%c0_60, %c0_61] : memref<1x64xf32, #tpu.memory_space<vmem>>, vector<1x64xf32>
    %171 = vector.broadcast %170 : vector<1x64xf32> to vector<16x64xf32>
    %172 = arith.addf %169, %171 : vector<16x64xf32>
    %cst_62 = arith.constant 5.000000e-01 : f32
    %173 = vector.broadcast %cst_62 : f32 to vector<16x64xf32>
    %174 = arith.mulf %173, %172 : vector<16x64xf32>
    %cst_63 = arith.constant 4.471500e-02 : f32
    %175 = vector.broadcast %cst_63 : f32 to vector<16x64xf32>
    %176 = arith.mulf %175, %172 : vector<16x64xf32>
    %177 = arith.mulf %176, %172 : vector<16x64xf32>
    %178 = arith.mulf %177, %172 : vector<16x64xf32>
    %179 = arith.addf %172, %178 : vector<16x64xf32>
    %cst_64 = arith.constant 0.797884583 : f32
    %180 = vector.broadcast %cst_64 : f32 to vector<16x64xf32>
    %181 = arith.mulf %180, %179 : vector<16x64xf32>
    %182 = math.tanh %181 : vector<16x64xf32>
    %cst_65 = arith.constant 1.000000e+00 : f32
    %183 = vector.broadcast %cst_65 : f32 to vector<16x64xf32>
    %184 = arith.addf %183, %182 : vector<16x64xf32>
    %185 = arith.mulf %174, %184 : vector<16x64xf32>
    %186 = arith.truncf %185 : vector<16x64xf32> to vector<16x64xbf16>
    %c0_66 = arith.constant 0 : index
    %c0_67 = arith.constant 0 : index
    %187 = vector.load %arg15[%c0_66, %c0_67] : memref<64x32xbf16, #tpu.memory_space<vmem>>, vector<64x32xbf16>
    %cst_68 = arith.constant dense<0.000000e+00> : vector<16x32xf32>
    %188 = tpu.matmul %186, %187, %cst_68 {dimension_numbers = #tpu.dot_dimension_numbers<[1], [0], [0], [1], [0, 0, 1, 1], [], []>} : vector<16x64xbf16>, vector<64x32xbf16>, vector<16x32xf32> -> vector<16x32xf32>
    %c0_69 = arith.constant 0 : index
    %c0_70 = arith.constant 0 : index
    %189 = vector.load %arg16[%c0_69, %c0_70] : memref<1x32xf32, #tpu.memory_space<vmem>>, vector<1x32xf32>
    %190 = vector.broadcast %189 : vector<1x32xf32> to vector<16x32xf32>
    %191 = arith.addf %188, %190 : vector<16x32xf32>
    %192 = arith.addf %191, %166 : vector<16x32xf32>
    %c0_71 = arith.constant 0 : index
    %c0_72 = arith.constant 0 : index
    %193 = vector.load %arg17[%c0_71, %c0_72] : memref<1x32xf32, #tpu.memory_space<vmem>>, vector<1x32xf32>
    %c0_73 = arith.constant 0 : index
    %c0_74 = arith.constant 0 : index
    %194 = vector.load %arg18[%c0_73, %c0_74] : memref<1x32xf32, #tpu.memory_space<vmem>>, vector<1x32xf32>
    %cst_75 = arith.constant dense<0.000000e+00> : vector<16xf32>
    %195 = vector.multi_reduction <add>, %192, %cst_75 [1] : vector<16x32xf32> to vector<16xf32>
    %196 = vector.shape_cast %195 : vector<16xf32> to vector<16x1xf32>
    %cst_76 = arith.constant 3.200000e+01 : f32
    %197 = vector.broadcast %cst_76 : f32 to vector<16x1xf32>
    %198 = arith.divf %196, %197 : vector<16x1xf32>
    %199 = vector.broadcast %198 : vector<16x1xf32> to vector<16x32xf32>
    %200 = arith.subf %192, %199 : vector<16x32xf32>
    %201 = arith.mulf %200, %200 : vector<16x32xf32>
    %cst_77 = arith.constant dense<0.000000e+00> : vector<16xf32>
    %202 = vector.multi_reduction <add>, %201, %cst_77 [1] : vector<16x32xf32> to vector<16xf32>
    %203 = vector.shape_cast %202 : vector<16xf32> to vector<16x1xf32>
    %cst_78 = arith.constant 3.200000e+01 : f32
    %204 = vector.broadcast %cst_78 : f32 to vector<16x1xf32>
    %205 = arith.divf %203, %204 : vector<16x1xf32>
    %206 = vector.broadcast %198 : vector<16x1xf32> to vector<16x32xf32>
    %207 = arith.subf %192, %206 : vector<16x32xf32>
    %cst_79 = arith.constant 9.99999996E-13 : f32
    %208 = vector.broadcast %cst_79 : f32 to vector<16x1xf32>
    %209 = arith.addf %205, %208 : vector<16x1xf32>
    %210 = math.rsqrt %209 : vector<16x1xf32>
    %211 = vector.broadcast %210 : vector<16x1xf32> to vector<16x32xf32>
    %212 = arith.mulf %207, %211 : vector<16x32xf32>
    %213 = vector.broadcast %193 : vector<1x32xf32> to vector<16x32xf32>
    %214 = arith.mulf %212, %213 : vector<16x32xf32>
    %215 = vector.broadcast %194 : vector<1x32xf32> to vector<16x32xf32>
    %216 = arith.addf %214, %215 : vector<16x32xf32>
    %217 = arith.truncf %216 : vector<16x32xf32> to vector<16x32xbf16>
    %c0_80 = arith.constant 0 : index
    %c0_81 = arith.constant 0 : index
    %218 = vector.load %arg19[%c0_80, %c0_81] : memref<32x96xbf16, #tpu.memory_space<vmem>>, vector<32x96xbf16>
    %cst_82 = arith.constant dense<0.000000e+00> : vector<16x96xf32>
    %219 = tpu.matmul %217, %218, %cst_82 {dimension_numbers = #tpu.dot_dimension_numbers<[1], [0], [0], [1], [0, 0, 1, 1], [], []>} : vector<16x32xbf16>, vector<32x96xbf16>, vector<16x96xf32> -> vector<16x96xf32>
    %c0_83 = arith.constant 0 : index
    %c0_84 = arith.constant 0 : index
    %220 = vector.load %arg20[%c0_83, %c0_84] : memref<1x96xf32, #tpu.memory_space<vmem>>, vector<1x96xf32>
    %221 = vector.broadcast %220 : vector<1x96xf32> to vector<16x96xf32>
    %222 = arith.addf %219, %221 : vector<16x96xf32>
    %223 = vector.extract_strided_slice %222 {offsets = [0, 0], sizes = [16, 8], strides = [1, 1]} : vector<16x96xf32> to vector<16x8xf32>
    %cst_85 = arith.constant 0.353553385 : f32
    %224 = vector.broadcast %cst_85 : f32 to vector<16x8xf32>
    %225 = arith.mulf %223, %224 : vector<16x8xf32>
    %226 = vector.shape_cast %225 : vector<16x8xf32> to vector<2x8x8xf32>
    %227 = vector.extract_strided_slice %222 {offsets = [0, 32], sizes = [16, 8], strides = [1, 1]} : vector<16x96xf32> to vector<16x8xf32>
    %228 = vector.shape_cast %227 : vector<16x8xf32> to vector<2x8x8xf32>
    %229 = vector.extract_strided_slice %222 {offsets = [0, 64], sizes = [16, 8], strides = [1, 1]} : vector<16x96xf32> to vector<16x8xf32>
    %230 = vector.shape_cast %229 : vector<16x8xf32> to vector<2x8x8xf32>
    "tpu.trace_start"() <{level = 10 : i32, message = "bqd,bkd->bqk"}> : () -> ()
    %cst_86 = arith.constant dense<0.000000e+00> : vector<2x8x8xf32>
    %231 = tpu.matmul %226, %228, %cst_86 {dimension_numbers = #tpu.dot_dimension_numbers<[2], [2], [1], [1], [0, 0, 0, 1, 1, 1], [0], [0]>} : vector<2x8x8xf32>, vector<2x8x8xf32>, vector<2x8x8xf32> -> vector<2x8x8xf32>
    "tpu.trace_stop"() : () -> ()
    %cst_87 = arith.constant dense<0xFF800000> : vector<2x8xf32>
    %232 = vector.multi_reduction <maximumf>, %231, %cst_87 [2] : vector<2x8x8xf32> to vector<2x8xf32>
    %233 = vector.shape_cast %232 : vector<2x8xf32> to vector<2x8x1xf32>
    %234 = vector.broadcast %233 : vector<2x8x1xf32> to vector<2x8x8xf32>
    %235 = arith.subf %231, %234 : vector<2x8x8xf32>
    %236 = math.exp %235 : vector<2x8x8xf32>
    %cst_88 = arith.constant dense<0.000000e+00> : vector<2x8xf32>
    %237 = vector.multi_reduction <add>, %236, %cst_88 [2] : vector<2x8x8xf32> to vector<2x8xf32>
    %238 = vector.shape_cast %237 : vector<2x8xf32> to vector<2x8x1xf32>
    %239 = tpu.reciprocal %238 {approx = true} : vector<2x8x1xf32> -> vector<2x8x1xf32>
    %240 = vector.broadcast %239 : vector<2x8x1xf32> to vector<2x8x8xf32>
    %241 = arith.mulf %236, %240 : vector<2x8x8xf32>
    "tpu.trace_start"() <{level = 10 : i32, message = "bqk,bkd->bqd"}> : () -> ()
    %cst_89 = arith.constant dense<0.000000e+00> : vector<2x8x8xf32>
    %242 = tpu.matmul %241, %230, %cst_89 {dimension_numbers = #tpu.dot_dimension_numbers<[2], [1], [1], [2], [0, 0, 0, 1, 1, 2], [0], [0]>} : vector<2x8x8xf32>, vector<2x8x8xf32>, vector<2x8x8xf32> -> vector<2x8x8xf32>
    "tpu.trace_stop"() : () -> ()
    %243 = vector.shape_cast %242 : vector<2x8x8xf32> to vector<16x8xf32>
    %244 = vector.extract_strided_slice %222 {offsets = [0, 8], sizes = [16, 8], strides = [1, 1]} : vector<16x96xf32> to vector<16x8xf32>
    %cst_90 = arith.constant 0.353553385 : f32
    %245 = vector.broadcast %cst_90 : f32 to vector<16x8xf32>
    %246 = arith.mulf %244, %245 : vector<16x8xf32>
    %247 = vector.shape_cast %246 : vector<16x8xf32> to vector<2x8x8xf32>
    %248 = vector.extract_strided_slice %222 {offsets = [0, 40], sizes = [16, 8], strides = [1, 1]} : vector<16x96xf32> to vector<16x8xf32>
    %249 = vector.shape_cast %248 : vector<16x8xf32> to vector<2x8x8xf32>
    %250 = vector.extract_strided_slice %222 {offsets = [0, 72], sizes = [16, 8], strides = [1, 1]} : vector<16x96xf32> to vector<16x8xf32>
    %251 = vector.shape_cast %250 : vector<16x8xf32> to vector<2x8x8xf32>
    "tpu.trace_start"() <{level = 10 : i32, message = "bqd,bkd->bqk"}> : () -> ()
    %cst_91 = arith.constant dense<0.000000e+00> : vector<2x8x8xf32>
    %252 = tpu.matmul %247, %249, %cst_91 {dimension_numbers = #tpu.dot_dimension_numbers<[2], [2], [1], [1], [0, 0, 0, 1, 1, 1], [0], [0]>} : vector<2x8x8xf32>, vector<2x8x8xf32>, vector<2x8x8xf32> -> vector<2x8x8xf32>
    "tpu.trace_stop"() : () -> ()
    %cst_92 = arith.constant dense<0xFF800000> : vector<2x8xf32>
    %253 = vector.multi_reduction <maximumf>, %252, %cst_92 [2] : vector<2x8x8xf32> to vector<2x8xf32>
    %254 = vector.shape_cast %253 : vector<2x8xf32> to vector<2x8x1xf32>
    %255 = vector.broadcast %254 : vector<2x8x1xf32> to vector<2x8x8xf32>
    %256 = arith.subf %252, %255 : vector<2x8x8xf32>
    %257 = math.exp %256 : vector<2x8x8xf32>
    %cst_93 = arith.constant dense<0.000000e+00> : vector<2x8xf32>
    %258 = vector.multi_reduction <add>, %257, %cst_93 [2] : vector<2x8x8xf32> to vector<2x8xf32>
    %259 = vector.shape_cast %258 : vector<2x8xf32> to vector<2x8x1xf32>
    %260 = tpu.reciprocal %259 {approx = true} : vector<2x8x1xf32> -> vector<2x8x1xf32>
    %261 = vector.broadcast %260 : vector<2x8x1xf32> to vector<2x8x8xf32>
    %262 = arith.mulf %257, %261 : vector<2x8x8xf32>
    "tpu.trace_start"() <{level = 10 : i32, message = "bqk,bkd->bqd"}> : () -> ()
    %cst_94 = arith.constant dense<0.000000e+00> : vector<2x8x8xf32>
    %263 = tpu.matmul %262, %251, %cst_94 {dimension_numbers = #tpu.dot_dimension_numbers<[2], [1], [1], [2], [0, 0, 0, 1, 1, 2], [0], [0]>} : vector<2x8x8xf32>, vector<2x8x8xf32>, vector<2x8x8xf32> -> vector<2x8x8xf32>
    "tpu.trace_stop"() : () -> ()
    %264 = vector.shape_cast %263 : vector<2x8x8xf32> to vector<16x8xf32>
    %265 = vector.extract_strided_slice %222 {offsets = [0, 16], sizes = [16, 8], strides = [1, 1]} : vector<16x96xf32> to vector<16x8xf32>
    %cst_95 = arith.constant 0.353553385 : f32
    %266 = vector.broadcast %cst_95 : f32 to vector<16x8xf32>
    %267 = arith.mulf %265, %266 : vector<16x8xf32>
    %268 = vector.shape_cast %267 : vector<16x8xf32> to vector<2x8x8xf32>
    %269 = vector.extract_strided_slice %222 {offsets = [0, 48], sizes = [16, 8], strides = [1, 1]} : vector<16x96xf32> to vector<16x8xf32>
    %270 = vector.shape_cast %269 : vector<16x8xf32> to vector<2x8x8xf32>
    %271 = vector.extract_strided_slice %222 {offsets = [0, 80], sizes = [16, 8], strides = [1, 1]} : vector<16x96xf32> to vector<16x8xf32>
    %272 = vector.shape_cast %271 : vector<16x8xf32> to vector<2x8x8xf32>
    "tpu.trace_start"() <{level = 10 : i32, message = "bqd,bkd->bqk"}> : () -> ()
    %cst_96 = arith.constant dense<0.000000e+00> : vector<2x8x8xf32>
    %273 = tpu.matmul %268, %270, %cst_96 {dimension_numbers = #tpu.dot_dimension_numbers<[2], [2], [1], [1], [0, 0, 0, 1, 1, 1], [0], [0]>} : vector<2x8x8xf32>, vector<2x8x8xf32>, vector<2x8x8xf32> -> vector<2x8x8xf32>
    "tpu.trace_stop"() : () -> ()
    %cst_97 = arith.constant dense<0xFF800000> : vector<2x8xf32>
    %274 = vector.multi_reduction <maximumf>, %273, %cst_97 [2] : vector<2x8x8xf32> to vector<2x8xf32>
    %275 = vector.shape_cast %274 : vector<2x8xf32> to vector<2x8x1xf32>
    %276 = vector.broadcast %275 : vector<2x8x1xf32> to vector<2x8x8xf32>
    %277 = arith.subf %273, %276 : vector<2x8x8xf32>
    %278 = math.exp %277 : vector<2x8x8xf32>
    %cst_98 = arith.constant dense<0.000000e+00> : vector<2x8xf32>
    %279 = vector.multi_reduction <add>, %278, %cst_98 [2] : vector<2x8x8xf32> to vector<2x8xf32>
    %280 = vector.shape_cast %279 : vector<2x8xf32> to vector<2x8x1xf32>
    %281 = tpu.reciprocal %280 {approx = true} : vector<2x8x1xf32> -> vector<2x8x1xf32>
    %282 = vector.broadcast %281 : vector<2x8x1xf32> to vector<2x8x8xf32>
    %283 = arith.mulf %278, %282 : vector<2x8x8xf32>
    "tpu.trace_start"() <{level = 10 : i32, message = "bqk,bkd->bqd"}> : () -> ()
    %cst_99 = arith.constant dense<0.000000e+00> : vector<2x8x8xf32>
    %284 = tpu.matmul %283, %272, %cst_99 {dimension_numbers = #tpu.dot_dimension_numbers<[2], [1], [1], [2], [0, 0, 0, 1, 1, 2], [0], [0]>} : vector<2x8x8xf32>, vector<2x8x8xf32>, vector<2x8x8xf32> -> vector<2x8x8xf32>
    "tpu.trace_stop"() : () -> ()
    %285 = vector.shape_cast %284 : vector<2x8x8xf32> to vector<16x8xf32>
    %286 = vector.extract_strided_slice %222 {offsets = [0, 24], sizes = [16, 8], strides = [1, 1]} : vector<16x96xf32> to vector<16x8xf32>
    %cst_100 = arith.constant 0.353553385 : f32
    %287 = vector.broadcast %cst_100 : f32 to vector<16x8xf32>
    %288 = arith.mulf %286, %287 : vector<16x8xf32>
    %289 = vector.shape_cast %288 : vector<16x8xf32> to vector<2x8x8xf32>
    %290 = vector.extract_strided_slice %222 {offsets = [0, 56], sizes = [16, 8], strides = [1, 1]} : vector<16x96xf32> to vector<16x8xf32>
    %291 = vector.shape_cast %290 : vector<16x8xf32> to vector<2x8x8xf32>
    %292 = vector.extract_strided_slice %222 {offsets = [0, 88], sizes = [16, 8], strides = [1, 1]} : vector<16x96xf32> to vector<16x8xf32>
    %293 = vector.shape_cast %292 : vector<16x8xf32> to vector<2x8x8xf32>
    "tpu.trace_start"() <{level = 10 : i32, message = "bqd,bkd->bqk"}> : () -> ()
    %cst_101 = arith.constant dense<0.000000e+00> : vector<2x8x8xf32>
    %294 = tpu.matmul %289, %291, %cst_101 {dimension_numbers = #tpu.dot_dimension_numbers<[2], [2], [1], [1], [0, 0, 0, 1, 1, 1], [0], [0]>} : vector<2x8x8xf32>, vector<2x8x8xf32>, vector<2x8x8xf32> -> vector<2x8x8xf32>
    "tpu.trace_stop"() : () -> ()
    %cst_102 = arith.constant dense<0xFF800000> : vector<2x8xf32>
    %295 = vector.multi_reduction <maximumf>, %294, %cst_102 [2] : vector<2x8x8xf32> to vector<2x8xf32>
    %296 = vector.shape_cast %295 : vector<2x8xf32> to vector<2x8x1xf32>
    %297 = vector.broadcast %296 : vector<2x8x1xf32> to vector<2x8x8xf32>
    %298 = arith.subf %294, %297 : vector<2x8x8xf32>
    %299 = math.exp %298 : vector<2x8x8xf32>
    %cst_103 = arith.constant dense<0.000000e+00> : vector<2x8xf32>
    %300 = vector.multi_reduction <add>, %299, %cst_103 [2] : vector<2x8x8xf32> to vector<2x8xf32>
    %301 = vector.shape_cast %300 : vector<2x8xf32> to vector<2x8x1xf32>
    %302 = tpu.reciprocal %301 {approx = true} : vector<2x8x1xf32> -> vector<2x8x1xf32>
    %303 = vector.broadcast %302 : vector<2x8x1xf32> to vector<2x8x8xf32>
    %304 = arith.mulf %299, %303 : vector<2x8x8xf32>
    "tpu.trace_start"() <{level = 10 : i32, message = "bqk,bkd->bqd"}> : () -> ()
    %cst_104 = arith.constant dense<0.000000e+00> : vector<2x8x8xf32>
    %305 = tpu.matmul %304, %293, %cst_104 {dimension_numbers = #tpu.dot_dimension_numbers<[2], [1], [1], [2], [0, 0, 0, 1, 1, 2], [0], [0]>} : vector<2x8x8xf32>, vector<2x8x8xf32>, vector<2x8x8xf32> -> vector<2x8x8xf32>
    "tpu.trace_stop"() : () -> ()
    %306 = vector.shape_cast %305 : vector<2x8x8xf32> to vector<16x8xf32>
    %307 = tpu.concatenate %243, %264, %285, %306 in 1 : vector<16x8xf32>, vector<16x8xf32>, vector<16x8xf32>, vector<16x8xf32> -> vector<16x32xf32>
    %308 = arith.truncf %307 : vector<16x32xf32> to vector<16x32xbf16>
    %c0_105 = arith.constant 0 : index
    %c0_106 = arith.constant 0 : index
    %309 = vector.load %arg21[%c0_105, %c0_106] : memref<32x32xbf16, #tpu.memory_space<vmem>>, vector<32x32xbf16>
    %cst_107 = arith.constant dense<0.000000e+00> : vector<16x32xf32>
    %310 = tpu.matmul %308, %309, %cst_107 {dimension_numbers = #tpu.dot_dimension_numbers<[1], [0], [0], [1], [0, 0, 1, 1], [], []>} : vector<16x32xbf16>, vector<32x32xbf16>, vector<16x32xf32> -> vector<16x32xf32>
    %c0_108 = arith.constant 0 : index
    %c0_109 = arith.constant 0 : index
    %311 = vector.load %arg22[%c0_108, %c0_109] : memref<1x32xf32, #tpu.memory_space<vmem>>, vector<1x32xf32>
    %312 = vector.broadcast %311 : vector<1x32xf32> to vector<16x32xf32>
    %313 = arith.addf %310, %312 : vector<16x32xf32>
    %314 = arith.addf %313, %216 : vector<16x32xf32>
    %c0_110 = arith.constant 0 : index
    %c0_111 = arith.constant 0 : index
    %315 = vector.load %arg23[%c0_110, %c0_111] : memref<1x32xf32, #tpu.memory_space<vmem>>, vector<1x32xf32>
    %c0_112 = arith.constant 0 : index
    %c0_113 = arith.constant 0 : index
    %316 = vector.load %arg24[%c0_112, %c0_113] : memref<1x32xf32, #tpu.memory_space<vmem>>, vector<1x32xf32>
    %cst_114 = arith.constant dense<0.000000e+00> : vector<16xf32>
    %317 = vector.multi_reduction <add>, %314, %cst_114 [1] : vector<16x32xf32> to vector<16xf32>
    %318 = vector.shape_cast %317 : vector<16xf32> to vector<16x1xf32>
    %cst_115 = arith.constant 3.200000e+01 : f32
    %319 = vector.broadcast %cst_115 : f32 to vector<16x1xf32>
    %320 = arith.divf %318, %319 : vector<16x1xf32>
    %321 = vector.broadcast %320 : vector<16x1xf32> to vector<16x32xf32>
    %322 = arith.subf %314, %321 : vector<16x32xf32>
    %323 = arith.mulf %322, %322 : vector<16x32xf32>
    %cst_116 = arith.constant dense<0.000000e+00> : vector<16xf32>
    %324 = vector.multi_reduction <add>, %323, %cst_116 [1] : vector<16x32xf32> to vector<16xf32>
    %325 = vector.shape_cast %324 : vector<16xf32> to vector<16x1xf32>
    %cst_117 = arith.constant 3.200000e+01 : f32
    %326 = vector.broadcast %cst_117 : f32 to vector<16x1xf32>
    %327 = arith.divf %325, %326 : vector<16x1xf32>
    %328 = vector.broadcast %320 : vector<16x1xf32> to vector<16x32xf32>
    %329 = arith.subf %314, %328 : vector<16x32xf32>
    %cst_118 = arith.constant 9.99999996E-13 : f32
    %330 = vector.broadcast %cst_118 : f32 to vector<16x1xf32>
    %331 = arith.addf %327, %330 : vector<16x1xf32>
    %332 = math.rsqrt %331 : vector<16x1xf32>
    %333 = vector.broadcast %332 : vector<16x1xf32> to vector<16x32xf32>
    %334 = arith.mulf %329, %333 : vector<16x32xf32>
    %335 = vector.broadcast %315 : vector<1x32xf32> to vector<16x32xf32>
    %336 = arith.mulf %334, %335 : vector<16x32xf32>
    %337 = vector.broadcast %316 : vector<1x32xf32> to vector<16x32xf32>
    %338 = arith.addf %336, %337 : vector<16x32xf32>
    %339 = arith.truncf %338 : vector<16x32xf32> to vector<16x32xbf16>
    %c0_119 = arith.constant 0 : index
    %c0_120 = arith.constant 0 : index
    %340 = vector.load %arg25[%c0_119, %c0_120] : memref<32x64xbf16, #tpu.memory_space<vmem>>, vector<32x64xbf16>
    %cst_121 = arith.constant dense<0.000000e+00> : vector<16x64xf32>
    %341 = tpu.matmul %339, %340, %cst_121 {dimension_numbers = #tpu.dot_dimension_numbers<[1], [0], [0], [1], [0, 0, 1, 1], [], []>} : vector<16x32xbf16>, vector<32x64xbf16>, vector<16x64xf32> -> vector<16x64xf32>
    %c0_122 = arith.constant 0 : index
    %c0_123 = arith.constant 0 : index
    %342 = vector.load %arg26[%c0_122, %c0_123] : memref<1x64xf32, #tpu.memory_space<vmem>>, vector<1x64xf32>
    %343 = vector.broadcast %342 : vector<1x64xf32> to vector<16x64xf32>
    %344 = arith.addf %341, %343 : vector<16x64xf32>
    %cst_124 = arith.constant 5.000000e-01 : f32
    %345 = vector.broadcast %cst_124 : f32 to vector<16x64xf32>
    %346 = arith.mulf %345, %344 : vector<16x64xf32>
    %cst_125 = arith.constant 4.471500e-02 : f32
    %347 = vector.broadcast %cst_125 : f32 to vector<16x64xf32>
    %348 = arith.mulf %347, %344 : vector<16x64xf32>
    %349 = arith.mulf %348, %344 : vector<16x64xf32>
    %350 = arith.mulf %349, %344 : vector<16x64xf32>
    %351 = arith.addf %344, %350 : vector<16x64xf32>
    %cst_126 = arith.constant 0.797884583 : f32
    %352 = vector.broadcast %cst_126 : f32 to vector<16x64xf32>
    %353 = arith.mulf %352, %351 : vector<16x64xf32>
    %354 = math.tanh %353 : vector<16x64xf32>
    %cst_127 = arith.constant 1.000000e+00 : f32
    %355 = vector.broadcast %cst_127 : f32 to vector<16x64xf32>
    %356 = arith.addf %355, %354 : vector<16x64xf32>
    %357 = arith.mulf %346, %356 : vector<16x64xf32>
    %358 = arith.truncf %357 : vector<16x64xf32> to vector<16x64xbf16>
    %c0_128 = arith.constant 0 : index
    %c0_129 = arith.constant 0 : index
    %359 = vector.load %arg27[%c0_128, %c0_129] : memref<64x32xbf16, #tpu.memory_space<vmem>>, vector<64x32xbf16>
    %cst_130 = arith.constant dense<0.000000e+00> : vector<16x32xf32>
    %360 = tpu.matmul %358, %359, %cst_130 {dimension_numbers = #tpu.dot_dimension_numbers<[1], [0], [0], [1], [0, 0, 1, 1], [], []>} : vector<16x64xbf16>, vector<64x32xbf16>, vector<16x32xf32> -> vector<16x32xf32>
    %c0_131 = arith.constant 0 : index
    %c0_132 = arith.constant 0 : index
    %361 = vector.load %arg28[%c0_131, %c0_132] : memref<1x32xf32, #tpu.memory_space<vmem>>, vector<1x32xf32>
    %362 = vector.broadcast %361 : vector<1x32xf32> to vector<16x32xf32>
    %363 = arith.addf %360, %362 : vector<16x32xf32>
    %364 = arith.addf %363, %338 : vector<16x32xf32>
    %c0_133 = arith.constant 0 : index
    %c0_134 = arith.constant 0 : index
    %365 = vector.load %arg29[%c0_133, %c0_134] : memref<1x32xf32, #tpu.memory_space<vmem>>, vector<1x32xf32>
    %c0_135 = arith.constant 0 : index
    %c0_136 = arith.constant 0 : index
    %366 = vector.load %arg30[%c0_135, %c0_136] : memref<1x32xf32, #tpu.memory_space<vmem>>, vector<1x32xf32>
    %cst_137 = arith.constant dense<0.000000e+00> : vector<16xf32>
    %367 = vector.multi_reduction <add>, %364, %cst_137 [1] : vector<16x32xf32> to vector<16xf32>
    %368 = vector.shape_cast %367 : vector<16xf32> to vector<16x1xf32>
    %cst_138 = arith.constant 3.200000e+01 : f32
    %369 = vector.broadcast %cst_138 : f32 to vector<16x1xf32>
    %370 = arith.divf %368, %369 : vector<16x1xf32>
    %371 = vector.broadcast %370 : vector<16x1xf32> to vector<16x32xf32>
    %372 = arith.subf %364, %371 : vector<16x32xf32>
    %373 = arith.mulf %372, %372 : vector<16x32xf32>
    %cst_139 = arith.constant dense<0.000000e+00> : vector<16xf32>
    %374 = vector.multi_reduction <add>, %373, %cst_139 [1] : vector<16x32xf32> to vector<16xf32>
    %375 = vector.shape_cast %374 : vector<16xf32> to vector<16x1xf32>
    %cst_140 = arith.constant 3.200000e+01 : f32
    %376 = vector.broadcast %cst_140 : f32 to vector<16x1xf32>
    %377 = arith.divf %375, %376 : vector<16x1xf32>
    %378 = vector.broadcast %370 : vector<16x1xf32> to vector<16x32xf32>
    %379 = arith.subf %364, %378 : vector<16x32xf32>
    %cst_141 = arith.constant 9.99999996E-13 : f32
    %380 = vector.broadcast %cst_141 : f32 to vector<16x1xf32>
    %381 = arith.addf %377, %380 : vector<16x1xf32>
    %382 = math.rsqrt %381 : vector<16x1xf32>
    %383 = vector.broadcast %382 : vector<16x1xf32> to vector<16x32xf32>
    %384 = arith.mulf %379, %383 : vector<16x32xf32>
    %385 = vector.broadcast %365 : vector<1x32xf32> to vector<16x32xf32>
    %386 = arith.mulf %384, %385 : vector<16x32xf32>
    %387 = vector.broadcast %366 : vector<1x32xf32> to vector<16x32xf32>
    %388 = arith.addf %386, %387 : vector<16x32xf32>
    %389 = arith.truncf %388 : vector<16x32xf32> to vector<16x32xbf16>
    %c0_142 = arith.constant 0 : index
    %c0_143 = arith.constant 0 : index
    %390 = vector.load %arg31[%c0_142, %c0_143] : memref<32x128xbf16, #tpu.memory_space<vmem>>, vector<32x128xbf16>
    %cst_144 = arith.constant dense<0.000000e+00> : vector<16x128xf32>
    %391 = tpu.matmul %389, %390, %cst_144 {dimension_numbers = #tpu.dot_dimension_numbers<[1], [0], [0], [1], [0, 0, 1, 1], [], []>} : vector<16x32xbf16>, vector<32x128xbf16>, vector<16x128xf32> -> vector<16x128xf32>
    %c0_145 = arith.constant 0 : index
    %c0_146 = arith.constant 0 : index
    %392 = vector.load %arg32[%c0_145, %c0_146] : memref<1x128xf32, #tpu.memory_space<vmem>>, vector<1x128xf32>
    %393 = vector.broadcast %392 : vector<1x128xf32> to vector<16x128xf32>
    %394 = arith.addf %391, %393 : vector<16x128xf32>
    %c0_147 = arith.constant 0 : index
    %c0_148 = arith.constant 0 : index
    %395 = vector.load %arg33[%c0_147, %c0_148] : memref<16x128xf32, #tpu.memory_space<vmem>>, vector<16x128xf32>
    tpu.vector_store %arg33[%c0_147, %c0_148], %394 {strides = array<i32>} : memref<16x128xf32, #tpu.memory_space<vmem>>, vector<16x128xf32>,
    return
  }
  func.func @transform_0(%arg0: i32) -> (i32, i32) {
    %c0_i32 = arith.constant 0 : i32
    %c0_i32_0 = arith.constant 0 : i32
    %c0_i32_1 = arith.constant 0 : i32
    return %c0_i32, %c0_i32_0 : i32, i32
  }
  func.func @transform_1(%arg0: i32) -> (i32, i32) {
    %c0_i32 = arith.constant 0 : i32
    %c0_i32_0 = arith.constant 0 : i32
    %c0_i32_1 = arith.constant 0 : i32
    return %c0_i32, %c0_i32_0 : i32, i32
  }
  func.func @transform_2(%arg0: i32) -> (i32, i32) {
    %c0_i32 = arith.constant 0 : i32
    %c0_i32_0 = arith.constant 0 : i32
    %c0_i32_1 = arith.constant 0 : i32
    return %c0_i32, %c0_i32_0 : i32, i32
  }
  func.func @transform_3(%arg0: i32) -> (i32, i32) {
    %c0_i32 = arith.constant 0 : i32
    %c0_i32_0 = arith.constant 0 : i32
    %c0_i32_1 = arith.constant 0 : i32
    return %c0_i32, %c0_i32_0 : i32, i32
  }
  func.func @transform_4(%arg0: i32) -> (i32, i32) {
    %c0_i32 = arith.constant 0 : i32
    %c0_i32_0 = arith.constant 0 : i32
    %c0_i32_1 = arith.constant 0 : i32
    return %c0_i32, %c0_i32_0 : i32, i32
  }
  func.func @transform_5(%arg0: i32) -> (i32, i32) {
    %c0_i32 = arith.constant 0 : i32
    %c0_i32_0 = arith.constant 0 : i32
    %c0_i32_1 = arith.constant 0 : i32
    return %c0_i32, %c0_i32_0 : i32, i32
  }
  func.func @transform_6(%arg0: i32) -> (i32, i32) {
    %c0_i32 = arith.constant 0 : i32
    %c0_i32_0 = arith.constant 0 : i32
    %c0_i32_1 = arith.constant 0 : i32
    return %c0_i32, %c0_i32_0 : i32, i32
  }
  func.func @transform_7(%arg0: i32) -> (i32, i32) {
    %c0_i32 = arith.constant 0 : i32
    %c0_i32_0 = arith.constant 0 : i32
    %c0_i32_1 = arith.constant 0 : i32
    return %c0_i32, %c0_i32_0 : i32, i32
  }
  func.func @transform_8(%arg0: i32) -> (i32, i32) {
    %c0_i32 = arith.constant 0 : i32
    %c0_i32_0 = arith.constant 0 : i32
    %c0_i32_1 = arith.constant 0 : i32
    return %c0_i32, %c0_i32_0 : i32, i32
  }
  func.func @transform_9(%arg0: i32) -> (i32, i32) {
    %c0_i32 = arith.constant 0 : i32
    %c0_i32_0 = arith.constant 0 : i32
    %c0_i32_1 = arith.constant 0 : i32
    return %c0_i32, %c0_i32_0 : i32, i32
  }
  func.func @transform_10(%arg0: i32) -> (i32, i32) {
    %c0_i32 = arith.constant 0 : i32
    %c0_i32_0 = arith.constant 0 : i32
    %c0_i32_1 = arith.constant 0 : i32
    return %c0_i32, %c0_i32_0 : i32, i32
  }
  func.func @transform_11(%arg0: i32) -> (i32, i32) {
    %c0_i32 = arith.constant 0 : i32
    %c0_i32_0 = arith.constant 0 : i32
    %c0_i32_1 = arith.constant 0 : i32
    return %c0_i32, %c0_i32_0 : i32, i32
  }
  func.func @transform_12(%arg0: i32) -> (i32, i32) {
    %c0_i32 = arith.constant 0 : i32
    %c0_i32_0 = arith.constant 0 : i32
    %c0_i32_1 = arith.constant 0 : i32
    return %c0_i32, %c0_i32_0 : i32, i32
  }
  func.func @transform_13(%arg0: i32) -> (i32, i32) {
    %c0_i32 = arith.constant 0 : i32
    %c0_i32_0 = arith.constant 0 : i32
    %c0_i32_1 = arith.constant 0 : i32
    return %c0_i32, %c0_i32_0 : i32, i32
  }
  func.func @transform_14(%arg0: i32) -> (i32, i32) {
    %c0_i32 = arith.constant 0 : i32
    %c0_i32_0 = arith.constant 0 : i32
    %c0_i32_1 = arith.constant 0 : i32
    return %c0_i32, %c0_i32_0 : i32, i32
  }
  func.func @transform_15(%arg0: i32) -> (i32, i32) {
    %c0_i32 = arith.constant 0 : i32
    %c0_i32_0 = arith.constant 0 : i32
    %c0_i32_1 = arith.constant 0 : i32
    return %c0_i32, %c0_i32_0 : i32, i32
  }
  func.func @transform_16(%arg0: i32) -> (i32, i32) {
    %c0_i32 = arith.constant 0 : i32
    %c0_i32_0 = arith.constant 0 : i32
    %c0_i32_1 = arith.constant 0 : i32
    return %c0_i32, %c0_i32_0 : i32, i32
  }
  func.func @transform_17(%arg0: i32) -> (i32, i32) {
    %c0_i32 = arith.constant 0 : i32
    %c0_i32_0 = arith.constant 0 : i32
    %c0_i32_1 = arith.constant 0 : i32
    return %c0_i32, %c0_i32_0 : i32, i32
  }
  func.func @transform_18(%arg0: i32) -> (i32, i32) {
    %c0_i32 = arith.constant 0 : i32
    %c0_i32_0 = arith.constant 0 : i32
    %c0_i32_1 = arith.constant 0 : i32
    return %c0_i32, %c0_i32_0 : i32, i32
  }
  func.func @transform_19(%arg0: i32) -> (i32, i32) {
    %c0_i32 = arith.constant 0 : i32
    %c0_i32_0 = arith.constant 0 : i32
    %c0_i32_1 = arith.constant 0 : i32
    return %c0_i32, %c0_i32_0 : i32, i32
  }
  func.func @transform_20(%arg0: i32) -> (i32, i32) {
    %c0_i32 = arith.constant 0 : i32
    %c0_i32_0 = arith.constant 0 : i32
    %c0_i32_1 = arith.constant 0 : i32
    return %c0_i32, %c0_i32_0 : i32, i32
  }
  func.func @transform_21(%arg0: i32) -> (i32, i32) {
    %c0_i32 = arith.constant 0 : i32
    %c0_i32_0 = arith.constant 0 : i32
    %c0_i32_1 = arith.constant 0 : i32
    return %c0_i32, %c0_i32_0 : i32, i32
  }
  func.func @transform_22(%arg0: i32) -> (i32, i32) {
    %c0_i32 = arith.constant 0 : i32
    %c0_i32_0 = arith.constant 0 : i32
    %c0_i32_1 = arith.constant 0 : i32
    return %c0_i32, %c0_i32_0 : i32, i32
  }
  func.func @transform_23(%arg0: i32) -> (i32, i32) {
    %c0_i32 = arith.constant 0 : i32
    %c0_i32_0 = arith.constant 0 : i32
    %c0_i32_1 = arith.constant 0 : i32
    return %c0_i32, %c0_i32_0 : i32, i32
  }
  func.func @transform_24(%arg0: i32) -> (i32, i32) {
    %c0_i32 = arith.constant 0 : i32
    %c0_i32_0 = arith.constant 0 : i32
    %c0_i32_1 = arith.constant 0 : i32
    return %c0_i32, %c0_i32_0 : i32, i32
  }
  func.func @transform_25(%arg0: i32) -> (i32, i32) {
    %c0_i32 = arith.constant 0 : i32
    %c0_i32_0 = arith.constant 0 : i32
    %c0_i32_1 = arith.constant 0 : i32
    return %c0_i32, %c0_i32_0 : i32, i32
  }
  func.func @transform_26(%arg0: i32) -> (i32, i32) {
    %c0_i32 = arith.constant 0 : i32
    %c0_i32_0 = arith.constant 0 : i32
    %c0_i32_1 = arith.constant 0 : i32
    return %c0_i32, %c0_i32_0 : i32, i32
  }
  func.func @transform_27(%arg0: i32) -> (i32, i32) {
    %c0_i32 = arith.constant 0 : i32
    %c0_i32_0 = arith.constant 0 : i32
    %c0_i32_1 = arith.constant 0 : i32
    return %c0_i32, %c0_i32_0 : i32, i32
  }
  func.func @transform_28(%arg0: i32) -> (i32, i32) {
    %c0_i32 = arith.constant 0 : i32
    %c0_i32_0 = arith.constant 0 : i32
    %c0_i32_1 = arith.constant 0 : i32
    return %c0_i32, %c0_i32_0 : i32, i32
  }
  func.func @transform_29(%arg0: i32) -> (i32, i32) {
    %c0_i32 = arith.constant 0 : i32
    %c0_i32_0 = arith.constant 0 : i32
    %c0_i32_1 = arith.constant 0 : i32
    return %c0_i32, %c0_i32_0 : i32, i32
  }
  func.func @transform_30(%arg0: i32) -> (i32, i32) {
    %c0_i32 = arith.constant 0 : i32
    %c0_i32_0 = arith.constant 0 : i32
    %c0_i32_1 = arith.constant 0 : i32
    return %c0_i32, %c0_i32_0 : i32, i32
  }
  func.func @transform_31(%arg0: i32) -> (i32, i32) {
    %c0_i32 = arith.constant 0 : i32
    %c0_i32_0 = arith.constant 0 : i32
    %c0_i32_1 = arith.constant 0 : i32
    return %c0_i32, %c0_i32_0 : i32, i32
  }
  func.func @transform_32(%arg0: i32) -> (i32, i32) {
    %c0_i32 = arith.constant 0 : i32
    %c0_i32_0 = arith.constant 0 : i32
    %c0_i32_1 = arith.constant 0 : i32
    return %c0_i32, %c0_i32_0 : i32, i32
  }
}

</mosaic_0001>

<llo_original>
// kernel: bert_softmax_forward.1
$region0: #{bert_softmax_forward.1}
  #allocation0 [shape = 'u32[]', space=smem, size = 0x4, offset = 0x4, fixed_abs, tag = 'smem constant byte address 0x4 - core index']
  #allocation1 [shape = 'u32[72,128]{1,0:T(1,128)}', space=vmem, size = 0x9000, scoped, tag = 'internal scratch']
  %s0 = inlined_call_operand.smem [shape: u32[33], index: -1, kind: input, shape index: {}]
  %s1 = sld [smem:[%s0]]
  %s2 = scalar_lea.smem %s0, 1
  %s3 = sld [smem:[%s2]]
  %s4 = scalar_lea.smem %s0, 2
  %s5 = sld [smem:[%s4]]
  %s6 = scalar_lea.smem %s0, 3
  %s7 = sld [smem:[%s6]]
  %s8 = scalar_lea.smem %s0, 4
  %s9 = sld [smem:[%s8]]
  %s10 = scalar_lea.smem %s0, 5
  %s11 = sld [smem:[%s10]]
  %s12 = scalar_lea.smem %s0, 6
  %s13 = sld [smem:[%s12]]
  %s14 = scalar_lea.smem %s0, 7
  %s15 = sld [smem:[%s14]]
  %s16 = scalar_lea.smem %s0, 8
  %s17 = sld [smem:[%s16]]
  %s18 = scalar_lea.smem %s0, 9
  %s19 = sld [smem:[%s18]]
  %s20 = scalar_lea.smem %s0, 10
  %s21 = sld [smem:[%s20]]
  %s22 = scalar_lea.smem %s0, 11
  %s23 = sld [smem:[%s22]]
  %s24 = scalar_lea.smem %s0, 12
  %s25 = sld [smem:[%s24]]
  %s26 = scalar_lea.smem %s0, 13
  %s27 = sld [smem:[%s26]]
  %s28 = scalar_lea.smem %s0, 14
  %s29 = sld [smem:[%s28]]
  %s30 = scalar_lea.smem %s0, 15
  %s31 = sld [smem:[%s30]]
  %s32 = scalar_lea.smem %s0, 16
  %s33 = sld [smem:[%s32]]
  %s34 = scalar_lea.smem %s0, 17
  %s35 = sld [smem:[%s34]]
  %s36 = scalar_lea.smem %s0, 18
  %s37 = sld [smem:[%s36]]
  %s38 = scalar_lea.smem %s0, 19
  %s39 = sld [smem:[%s38]]
  %s40 = scalar_lea.smem %s0, 20
  %s41 = sld [smem:[%s40]]
  %s42 = scalar_lea.smem %s0, 21
  %s43 = sld [smem:[%s42]]
  %s44 = scalar_lea.smem %s0, 22
  %s45 = sld [smem:[%s44]]
  %s46 = scalar_lea.smem %s0, 23
  %s47 = sld [smem:[%s46]]
  %s48 = scalar_lea.smem %s0, 24
  %s49 = sld [smem:[%s48]]
  %s50 = scalar_lea.smem %s0, 25
  %s51 = sld [smem:[%s50]]
  %s52 = scalar_lea.smem %s0, 26
  %s53 = sld [smem:[%s52]]
  %s54 = scalar_lea.smem %s0, 27
  %s55 = sld [smem:[%s54]]
  %s56 = scalar_lea.smem %s0, 28
  %s57 = sld [smem:[%s56]]
  %s58 = scalar_lea.smem %s0, 29
  %s59 = sld [smem:[%s58]]
  %s60 = scalar_lea.smem %s0, 30
  %s61 = sld [smem:[%s60]]
  %s62 = scalar_lea.smem %s0, 31
  %s63 = sld [smem:[%s62]]
  %s64 = scalar_lea.smem %s0, 32
  %s65 = sld [smem:[%s64]]
  %s66 = sld [smem:[#allocation0]]
  $region138: #{bert_softmax_forward.1} parent=0
    _
  %s68 = ssub.s32 1, %s66
  %s69 = scalar_select 0, %s68, %s66
  // Predicated region
  $region2: #{bert_softmax_forward.1} parent=0 // pred_check
    _
  $region3: #{bert_softmax_forward.1} parent=0 // pred_check_branch
    %71 = sbr.rel (0) target = $region5
  $region4: #{bert_softmax_forward.1} parent=0 // pred_region
    _
  $region5: #{bert_softmax_forward.1} parent=0 // pred_fallthru
    _
  // Predicated region
  $region6: #{bert_softmax_forward.1} parent=0 // pred_check
    _
  $region7: #{bert_softmax_forward.1} parent=0 // pred_check_branch
    %73 = sbr.rel (0) target = $region9
  $region8: #{bert_softmax_forward.1} parent=0 // pred_region
    _
  $region9: #{bert_softmax_forward.1} parent=0 // pred_fallthru
    _
  // Predicated region
  $region10: #{bert_softmax_forward.1} parent=0 // pred_check
    _
  $region11: #{bert_softmax_forward.1} parent=0 // pred_check_branch
    %75 = sbr.rel (0) target = $region13
  $region12: #{bert_softmax_forward.1} parent=0 // pred_region
    _
  $region13: #{bert_softmax_forward.1} parent=0 // pred_fallthru
    _
  // Predicated region
  $region14: #{bert_softmax_forward.1} parent=0 // pred_check
    _
  $region15: #{bert_softmax_forward.1} parent=0 // pred_check_branch
    %77 = sbr.rel (0) target = $region17
  $region16: #{bert_softmax_forward.1} parent=0 // pred_region
    _
  $region17: #{bert_softmax_forward.1} parent=0 // pred_fallthru
    _
  // Predicated region
  $region18: #{bert_softmax_forward.1} parent=0 // pred_check
    _
  $region19: #{bert_softmax_forward.1} parent=0 // pred_check_branch
    %79 = sbr.rel (0) target = $region21
  $region20: #{bert_softmax_forward.1} parent=0 // pred_region
    _
  $region21: #{bert_softmax_forward.1} parent=0 // pred_fallthru
    _
  // Predicated region
  $region22: #{bert_softmax_forward.1} parent=0 // pred_check
    _
  $region23: #{bert_softmax_forward.1} parent=0 // pred_check_branch
    %81 = sbr.rel (0) target = $region25
  $region24: #{bert_softmax_forward.1} parent=0 // pred_region
    _
  $region25: #{bert_softmax_forward.1} parent=0 // pred_fallthru
    _
  // Predicated region
  $region26: #{bert_softmax_forward.1} parent=0 // pred_check
    _
  $region27: #{bert_softmax_forward.1} parent=0 // pred_check_branch
    %83 = sbr.rel (0) target = $region29
  $region28: #{bert_softmax_forward.1} parent=0 // pred_region
    _
  $region29: #{bert_softmax_forward.1} parent=0 // pred_fallthru
    _
  // Predicated region
  $region30: #{bert_softmax_forward.1} parent=0 // pred_check
    _
  $region31: #{bert_softmax_forward.1} parent=0 // pred_check_branch
    %85 = sbr.rel (0) target = $region33
  $region32: #{bert_softmax_forward.1} parent=0 // pred_region
    _
  $region33: #{bert_softmax_forward.1} parent=0 // pred_fallthru
    _
  // Predicated region
  $region34: #{bert_softmax_forward.1} parent=0 // pred_check
    _
  $region35: #{bert_softmax_forward.1} parent=0 // pred_check_branch
    %87 = sbr.rel (0) target = $region37
  $region36: #{bert_softmax_forward.1} parent=0 // pred_region
    _
  $region37: #{bert_softmax_forward.1} parent=0 // pred_fallthru
    _
  // Predicated region
  $region38: #{bert_softmax_forward.1} parent=0 // pred_check
    _
  $region39: #{bert_softmax_forward.1} parent=0 // pred_check_branch
    %89 = sbr.rel (0) target = $region41
  $region40: #{bert_softmax_forward.1} parent=0 // pred_region
    _
  $region41: #{bert_softmax_forward.1} parent=0 // pred_fallthru
    _
  // Predicated region
  $region42: #{bert_softmax_forward.1} parent=0 // pred_check
    _
  $region43: #{bert_softmax_forward.1} parent=0 // pred_check_branch
    %91 = sbr.rel (0) target = $region45
  $region44: #{bert_softmax_forward.1} parent=0 // pred_region
    _
  $region45: #{bert_softmax_forward.1} parent=0 // pred_fallthru
    _
  // Predicated region
  $region46: #{bert_softmax_forward.1} parent=0 // pred_check
    _
  $region47: #{bert_softmax_forward.1} parent=0 // pred_check_branch
    %93 = sbr.rel (0) target = $region49
  $region48: #{bert_softmax_forward.1} parent=0 // pred_region
    _
  $region49: #{bert_softmax_forward.1} parent=0 // pred_fallthru
    _
  // Predicated region
  $region50: #{bert_softmax_forward.1} parent=0 // pred_check
    _
  $region51: #{bert_softmax_forward.1} parent=0 // pred_check_branch
    %95 = sbr.rel (0) target = $region53
  $region52: #{bert_softmax_forward.1} parent=0 // pred_region
    _
  $region53: #{bert_softmax_forward.1} parent=0 // pred_fallthru
    _
  // Predicated region
  $region54: #{bert_softmax_forward.1} parent=0 // pred_check
    _
  $region55: #{bert_softmax_forward.1} parent=0 // pred_check_branch
    %97 = sbr.rel (0) target = $region57
  $region56: #{bert_softmax_forward.1} parent=0 // pred_region
    _
  $region57: #{bert_softmax_forward.1} parent=0 // pred_fallthru
    _
  // Predicated region
  $region58: #{bert_softmax_forward.1} parent=0 // pred_check
    _
  $region59: #{bert_softmax_forward.1} parent=0 // pred_check_branch
    %99 = sbr.rel (0) target = $region61
  $region60: #{bert_softmax_forward.1} parent=0 // pred_region
    _
  $region61: #{bert_softmax_forward.1} parent=0 // pred_fallthru
    _
  // Predicated region
  $region62: #{bert_softmax_forward.1} parent=0 // pred_check
    _
  $region63: #{bert_softmax_forward.1} parent=0 // pred_check_branch
    %101 = sbr.rel (0) target = $region65
  $region64: #{bert_softmax_forward.1} parent=0 // pred_region
    _
  $region65: #{bert_softmax_forward.1} parent=0 // pred_fallthru
    _
  // Predicated region
  $region66: #{bert_softmax_forward.1} parent=0 // pred_check
    _
  $region67: #{bert_softmax_forward.1} parent=0 // pred_check_branch
    %103 = sbr.rel (0) target = $region69
  $region68: #{bert_softmax_forward.1} parent=0 // pred_region
    _
  $region69: #{bert_softmax_forward.1} parent=0 // pred_fallthru
    _
  // Predicated region
  $region70: #{bert_softmax_forward.1} parent=0 // pred_check
    _
  $region71: #{bert_softmax_forward.1} parent=0 // pred_check_branch
    %105 = sbr.rel (0) target = $region73
  $region72: #{bert_softmax_forward.1} parent=0 // pred_region
    _
  $region73: #{bert_softmax_forward.1} parent=0 // pred_fallthru
    _
  // Predicated region
  $region74: #{bert_softmax_forward.1} parent=0 // pred_check
    _
  $region75: #{bert_softmax_forward.1} parent=0 // pred_check_branch
    %107 = sbr.rel (0) target = $region77
  $region76: #{bert_softmax_forward.1} parent=0 // pred_region
    _
  $region77: #{bert_softmax_forward.1} parent=0 // pred_fallthru
    _
  // Predicated region
  $region78: #{bert_softmax_forward.1} parent=0 // pred_check
    _
  $region79: #{bert_softmax_forward.1} parent=0 // pred_check_branch
    %109 = sbr.rel (0) target = $region81
  $region80: #{bert_softmax_forward.1} parent=0 // pred_region
    _
  $region81: #{bert_softmax_forward.1} parent=0 // pred_fallthru
    _
  // Predicated region
  $region82: #{bert_softmax_forward.1} parent=0 // pred_check
    _
  $region83: #{bert_softmax_forward.1} parent=0 // pred_check_branch
    %111 = sbr.rel (0) target = $region85
  $region84: #{bert_softmax_forward.1} parent=0 // pred_region
    _
  $region85: #{bert_softmax_forward.1} parent=0 // pred_fallthru
    _
  // Predicated region
  $region86: #{bert_softmax_forward.1} parent=0 // pred_check
    _
  $region87: #{bert_softmax_forward.1} parent=0 // pred_check_branch
    %113 = sbr.rel (0) target = $region89
  $region88: #{bert_softmax_forward.1} parent=0 // pred_region
    _
  $region89: #{bert_softmax_forward.1} parent=0 // pred_fallthru
    _
  // Predicated region
  $region90: #{bert_softmax_forward.1} parent=0 // pred_check
    _
  $region91: #{bert_softmax_forward.1} parent=0 // pred_check_branch
    %115 = sbr.rel (0) target = $region93
  $region92: #{bert_softmax_forward.1} parent=0 // pred_region
    _
  $region93: #{bert_softmax_forward.1} parent=0 // pred_fallthru
    _
  // Predicated region
  $region94: #{bert_softmax_forward.1} parent=0 // pred_check
    _
  $region95: #{bert_softmax_forward.1} parent=0 // pred_check_branch
    %117 = sbr.rel (0) target = $region97
  $region96: #{bert_softmax_forward.1} parent=0 // pred_region
    _
  $region97: #{bert_softmax_forward.1} parent=0 // pred_fallthru
    _
  // Predicated region
  $region98: #{bert_softmax_forward.1} parent=0 // pred_check
    _
  $region99: #{bert_softmax_forward.1} parent=0 // pred_check_branch
    %119 = sbr.rel (0) target = $region101
  $region100: #{bert_softmax_forward.1} parent=0 // pred_region
    _
  $region101: #{bert_softmax_forward.1} parent=0 // pred_fallthru
    _
  // Predicated region
  $region102: #{bert_softmax_forward.1} parent=0 // pred_check
    _
  $region103: #{bert_softmax_forward.1} parent=0 // pred_check_branch
    %121 = sbr.rel (0) target = $region105
  $region104: #{bert_softmax_forward.1} parent=0 // pred_region
    _
  $region105: #{bert_softmax_forward.1} parent=0 // pred_fallthru
    _
  // Predicated region
  $region106: #{bert_softmax_forward.1} parent=0 // pred_check
    _
  $region107: #{bert_softmax_forward.1} parent=0 // pred_check_branch
    %123 = sbr.rel (0) target = $region109
  $region108: #{bert_softmax_forward.1} parent=0 // pred_region
    _
  $region109: #{bert_softmax_forward.1} parent=0 // pred_fallthru
    _
  // Predicated region
  $region110: #{bert_softmax_forward.1} parent=0 // pred_check
    _
  $region111: #{bert_softmax_forward.1} parent=0 // pred_check_branch
    %125 = sbr.rel (0) target = $region113
  $region112: #{bert_softmax_forward.1} parent=0 // pred_region
    _
  $region113: #{bert_softmax_forward.1} parent=0 // pred_fallthru
    _
  // Predicated region
  $region114: #{bert_softmax_forward.1} parent=0 // pred_check
    _
  $region115: #{bert_softmax_forward.1} parent=0 // pred_check_branch
    %127 = sbr.rel (0) target = $region117
  $region116: #{bert_softmax_forward.1} parent=0 // pred_region
    _
  $region117: #{bert_softmax_forward.1} parent=0 // pred_fallthru
    _
  // Predicated region
  $region118: #{bert_softmax_forward.1} parent=0 // pred_check
    _
  $region119: #{bert_softmax_forward.1} parent=0 // pred_check_branch
    %129 = sbr.rel (0) target = $region121
  $region120: #{bert_softmax_forward.1} parent=0 // pred_region
    _
  $region121: #{bert_softmax_forward.1} parent=0 // pred_fallthru
    _
  // Predicated region
  $region122: #{bert_softmax_forward.1} parent=0 // pred_check
    _
  $region123: #{bert_softmax_forward.1} parent=0 // pred_check_branch
    %131 = sbr.rel (0) target = $region125
  $region124: #{bert_softmax_forward.1} parent=0 // pred_region
    _
  $region125: #{bert_softmax_forward.1} parent=0 // pred_fallthru
    _
  // Predicated region
  $region126: #{bert_softmax_forward.1} parent=0 // pred_check
    _
  $region127: #{bert_softmax_forward.1} parent=0 // pred_check_branch
    %133 = sbr.rel (0) target = $region129
  $region128: #{bert_softmax_forward.1} parent=0 // pred_region
    _
  $region129: #{bert_softmax_forward.1} parent=0 // pred_fallthru
    _
  %v135 = vlaneseq
  %v136 = vand.u32 %v135, 127
  %v137 = vld [vmem:[%s1] sm:$0xff]
  %v138 = vld [vmem:[%s1 + $0x8] sm:$0xff]
  %139 = vset.pattern.permute.xlu0 0
  %140 = vperm.xlu0 %139, %v137
  %v141 = vpop.permute.xlu0 %140
  %142 = vset.pattern.permute.xlu0 0
  %143 = vperm.xlu0 %142, %v138
  %v144 = vpop.permute.xlu0 %143
  %vm145 = vcmp.eq.s32.totalorder %v136, %v141
  %vm146 = vcmp.eq.s32.totalorder %v136, %v144
  %v147 = vld [vmem:[%s5] sm:$0xff]
  %v148 = vld [vmem:[%s5 + $0x8] sm:$0xff]
  %v149 = vadd.s32 %v147, 56
  %v150 = vadd.s32 %v148, 56
  %151 = vset.pattern.permute.xlu0 0
  %152 = vperm.xlu0 %151, %v149
  %v153 = vpop.permute.xlu0 %152
  %154 = vset.pattern.permute.xlu0 0
  %155 = vperm.xlu0 %154, %v150
  %v156 = vpop.permute.xlu0 %155
  %vm157 = vcmp.eq.s32.totalorder %v136, %v153
  %vm158 = vcmp.eq.s32.totalorder %v136, %v156
  %vm159 = vmor %vm145, %vm157
  %vm160 = vmor %vm146, %vm158
  %v161 = vld [vmem:[%s3] sm:$0xff]
  %v162 = vld [vmem:[%s3 + $0x8] sm:$0xff]
  %v163 = vadd.s32 %v161, 72
  %v164 = vadd.s32 %v162, 72
  %165 = vset.pattern.permute.xlu0 0
  %166 = vperm.xlu0 %165, %v163
  %v167 = vpop.permute.xlu0 %166
  %168 = vset.pattern.permute.xlu0 0
  %169 = vperm.xlu0 %168, %v164
  %v170 = vpop.permute.xlu0 %169
  %vm171 = vcmp.eq.s32.totalorder %v136, %v167
  %vm172 = vcmp.eq.s32.totalorder %v136, %v170
  %vm173 = vmor %vm159, %vm171
  %vm174 = vmor %vm160, %vm172
  %v175 = vsel %vm173, 1.0, 0.0
  %v176 = vsel %vm174, 1.0, 0.0
  %v177 = vld [vmem:[%s7] sm:$0xff]
  %v178 = vld [vmem:[%s7 + $0x8] sm:$0xff]
  %v179 = vld [vmem:[%s7 + $0x10] sm:$0xff]
  %v180 = vld [vmem:[%s7 + $0x18] sm:$0xff]
  %v181 = vld [vmem:[%s7 + $0x20] sm:$0xff]
  %v182 = vld [vmem:[%s7 + $0x28] sm:$0xff]
  %v183 = vld [vmem:[%s7 + $0x30] sm:$0xff]
  %v184 = vld [vmem:[%s7 + $0x38] sm:$0xff]
  %v185 = vld [vmem:[%s7 + $0x40] sm:$0xff]
  %v186 = vld [vmem:[%s7 + $0x48] sm:$0xff]
  %vm187 = vcmask 654336
  %v189 = vsel %vm187, %v175, 0
  %v192 = vsel %vm187, %v176, 0
  %194 = vmatpush.msra.mxu0 0.0
  %195 = vmatpush.msra.mxu0 0.0
  %196 = vmatpush.msra.mxu0 0.0
  %197 = vmatpush.msra.mxu0 0.0
  %198 = vmatpush.msra.mxu0 0.0
  %199 = vmatpush.msra.mxu0 0.0
  %200 = vmatpush.msra.mxu0 %v186
  %201 = vmatpush.msra.mxu0 %v185
  %202 = vmatpush.msra.mxu0 %v184
  %203 = vmatpush.msra.mxu0 %v183
  %204 = vmatpush.msra.mxu0 %v182
  %205 = vmatpush.msra.mxu0 %v181
  %206 = vmatpush.msra.mxu0 %v180
  %207 = vmatpush.msra.mxu0 %v179
  %208 = vmatpush.msra.mxu0 %v178
  %209 = vmatpush.msra.mxu0 %v177
  %210 = vmatmul.f32.gmra.mxu0 %v189
  %v211 = vpop.f32.mrf.mxu0
  %v212 = vadd.f32 0.0, %v211
  %213 = vmatmul.f32.gmra.mxu0 %v192
  %v214 = vpop.f32.mrf.mxu0
  %v215 = vadd.f32 0.0, %v214
  %216 = vdwg.mxu0
  %v217 = vld [vmem:[%s9] sm:$0x1]
  %v218 = vld [vmem:[%s11] sm:$0x1]
  %vm219 = vcmask 261120
  %v220 = vsel %vm219, %v212, 0.0
  %221 = vadd.xlane.f32.xlu0 %v220
  %v222 = vpop.xlane.xlu0 %221
  %v223 = vsel %vm219, %v215, 0.0
  %224 = vadd.xlane.f32.xlu0 %v223
  %v225 = vpop.xlane.xlu0 %224
  %v226 = vrcp.pop 32.0
  %v227 = vmul.f32 32.0, %v226
  %v228 = vsub.f32 1.0, %v227
  %v229 = vmul.f32 %v226, %v228
  %v230 = vadd.f32 %v226, %v229
  %vm231 = vweird.f32 %v226
  %v232 = vsel %vm231, %v226, %v230
  %v233 = vmul.f32 %v222, %v232
  %v234 = vmul.f32 %v225, %v232
  %v235 = vsub.f32 %v212, %v233
  %v236 = vsub.f32 %v215, %v234
  %v237 = vmul.f32 %v235, %v235
  %v238 = vmul.f32 %v236, %v236
  %v239 = vsel %vm219, %v237, 0.0
  %240 = vadd.xlane.f32.xlu0 %v239
  %v241 = vpop.xlane.xlu0 %240
  %v242 = vsel %vm219, %v238, 0.0
  %243 = vadd.xlane.f32.xlu0 %v242
  %v244 = vpop.xlane.xlu0 %243
  %v245 = vmul.f32 %v241, %v232
  %v246 = vmul.f32 %v244, %v232
  %v247 = vadd.f32 %v245, 1e-12
  %v248 = vadd.f32 %v246, 1e-12
  %v249 = vrsqrt.pop %v247
  %v250 = vmul.f32 %v249, %v247
  %v251 = vmul.f32 %v250, %v249
  %v252 = vmul.f32 0.5, %v251
  %v253 = vsub.f32 1.5, %v252
  %v254 = vmul.f32 %v249, %v253
  %vm255 = vweird.f32 %v247
  %vm256 = vweird.f32 %v249
  %vm257 = vmor %vm255, %vm256
  %v258 = vsel %vm257, %v249, %v254
  %v259 = vrsqrt.pop %v248
  %v260 = vmul.f32 %v259, %v248
  %v261 = vmul.f32 %v260, %v259
  %v262 = vmul.f32 0.5, %v261
  %v263 = vsub.f32 1.5, %v262
  %v264 = vmul.f32 %v259, %v263
  %vm265 = vweird.f32 %v248
  %vm266 = vweird.f32 %v259
  %vm267 = vmor %vm265, %vm266
  %v268 = vsel %vm267, %v259, %v264
  %v269 = vmul.f32 %v235, %v258
  %v270 = vmul.f32 %v236, %v268
  %v272 = vperm.slane %v217, 0
  %v274 = vmul.f32 %v269, %v272
  %v275 = vmul.f32 %v270, %v272
  %v277 = vperm.slane %v218, 0
  %v279 = vadd.f32 %v274, %v277
  %v280 = vadd.f32 %v275, %v277
  %v281 = vpack.c.bf16 %v280, %v279
  %v282 = vld [vmem:[%s13] sm:$0xf]
  %v283 = vld [vmem:[%s13 + $0x4] sm:$0xf]
  %v284 = vld [vmem:[%s13 + $0x8] sm:$0xf]
  %v285 = vld [vmem:[%s13 + $0xc] sm:$0xf]
  %v286 = vld [vmem:[%s15] sm:$0x1]
  %v288 = vperm.slane %v286, 0
  %v294 = vunpack.c.l.b16 %v282
  %v295 = vunpack.c.l.b16 %v283
  %v296 = vunpack.c.l.b16 %v284
  %v297 = vunpack.c.l.b16 %v285
  %v298 = vpack.c.b16 %v295, %v294
  %v299 = vpack.c.b16 %v297, %v296
  %v303 = vsel %vm219, %v281, 0
  %305 = vmatpush.bf16.msra.mxu0 0
  %306 = vmatpush.bf16.msra.mxu0 0
  %307 = vmatpush.bf16.msra.mxu0 0
  %308 = vmatpush.bf16.msra.mxu0 0
  %309 = vmatpush.bf16.msra.mxu0 0
  %310 = vmatpush.bf16.msra.mxu0 0
  %311 = vmatpush.bf16.msra.mxu0 %v299
  %312 = vmatpush.bf16.msra.mxu0 %v298
  %313 = vmatmul.bf16.gmra.mxu0 %v303
  %v314 = vpop.f32.mrf.mxu0
  %v315 = vadd.f32 %v288, %v314
  %v316 = vpop.f32.mrf.mxu0
  %v317 = vadd.f32 %v288, %v316
  %318 = vdwg.mxu0
  %v319 = vmul.f32 %v315, 0.35355338
  %v320 = vmul.f32 %v317, 0.35355338
  %322 = vrot.lane.b32.xlu0 %v315, 96
  %v323 = vpop.permute.xlu0 %322
  %vm324 = vcmask 64512
  %v326 = vsel %vm324, %v319, 0
  %v328 = vsel %vm324, %v323, 0
  %330 = vmatpush.xpose.msra.mxu0 0.0
  %331 = vmatpush.xpose.msra.mxu0 0.0
  %332 = vmatpush.xpose.msra.mxu0 0.0
  %333 = vmatpush.xpose.msra.mxu0 0.0
  %334 = vmatpush.xpose.msra.mxu0 0.0
  %335 = vmatpush.xpose.msra.mxu0 0.0
  %336 = vmatpush.xpose.msra.mxu0 0.0
  %337 = vmatpush.xpose.msra.mxu0 0.0
  %338 = vmatpush.xpose.msra.mxu0 0.0
  %339 = vmatpush.xpose.msra.mxu0 0.0
  %340 = vmatpush.xpose.msra.mxu0 0.0
  %341 = vmatpush.xpose.msra.mxu0 0.0
  %342 = vmatpush.xpose.msra.mxu0 0.0
  %343 = vmatpush.xpose.msra.mxu0 0.0
  %344 = vmatpush.xpose.msra.mxu0 0.0
  %345 = vmatpush.xpose.msra.mxu0 %v328
  %346 = vmatmul.f32.gmra.mxu0 %v326
  %v347 = vpop.f32.mrf.mxu0
  %v348 = vadd.f32 0.0, %v347
  %349 = vdwg.mxu0
  %351 = vrot.lane.b32.xlu0 %v317, 96
  %v352 = vpop.permute.xlu0 %351
  %v354 = vsel %vm324, %v320, 0
  %v356 = vsel %vm324, %v352, 0
  %358 = vmatpush.xpose.msra.mxu0 0.0
  %359 = vmatpush.xpose.msra.mxu0 0.0
  %360 = vmatpush.xpose.msra.mxu0 0.0
  %361 = vmatpush.xpose.msra.mxu0 0.0
  %362 = vmatpush.xpose.msra.mxu0 0.0
  %363 = vmatpush.xpose.msra.mxu0 0.0
  %364 = vmatpush.xpose.msra.mxu0 0.0
  %365 = vmatpush.xpose.msra.mxu0 0.0
  %366 = vmatpush.xpose.msra.mxu0 0.0
  %367 = vmatpush.xpose.msra.mxu0 0.0
  %368 = vmatpush.xpose.msra.mxu0 0.0
  %369 = vmatpush.xpose.msra.mxu0 0.0
  %370 = vmatpush.xpose.msra.mxu0 0.0
  %371 = vmatpush.xpose.msra.mxu0 0.0
  %372 = vmatpush.xpose.msra.mxu0 0.0
  %373 = vmatpush.xpose.msra.mxu0 %v356
  %374 = vmatmul.f32.gmra.mxu0 %v354
  %v375 = vpop.f32.mrf.mxu0
  %v376 = vadd.f32 0.0, %v375
  %377 = vdwg.mxu0
  %v378 = vsel %vm324, %v348, -inf
  %379 = vmax.xlane.f32.xlu0 %v378
  %v380 = vpop.xlane.xlu0 %379
  %v381 = vsel %vm324, %v376, -inf
  %382 = vmax.xlane.f32.xlu0 %v381
  %v383 = vpop.xlane.xlu0 %382
  %v384 = vsub.f32 %v348, %v380
  %v385 = vsub.f32 %v376, %v383
  %v386 = vmul.f32 %v384, 1.442695
  %v387 = vpow.pop %v386
  %v388 = vmul.f32 %v385, 1.442695
  %v389 = vpow.pop %v388
  %v390 = vsel %vm324, %v387, 0.0
  %391 = vadd.xlane.f32.xlu0 %v390
  %v392 = vpop.xlane.xlu0 %391
  %v393 = vsel %vm324, %v389, 0.0
  %394 = vadd.xlane.f32.xlu0 %v393
  %v395 = vpop.xlane.xlu0 %394
  %v396 = vrcp.pop %v392
  %v397 = vrcp.pop %v395
  %v398 = vmul.f32 %v387, %v396
  %v399 = vmul.f32 %v389, %v397
  %400 = vrot.lane.b32.xlu0 %v315, 64
  %v401 = vpop.permute.xlu0 %400
  %v404 = vsel %vm324, %v398, 0
  %406 = vmatpush.msra.mxu0 0.0
  %407 = vmatpush.msra.mxu0 0.0
  %408 = vmatpush.msra.mxu0 0.0
  %409 = vmatpush.msra.mxu0 0.0
  %410 = vmatpush.msra.mxu0 0.0
  %411 = vmatpush.msra.mxu0 0.0
  %412 = vmatpush.msra.mxu0 0.0
  %413 = vmatpush.msra.mxu0 0.0
  %414 = vmatpush.msra.mxu0 0.0
  %415 = vmatpush.msra.mxu0 0.0
  %416 = vmatpush.msra.mxu0 0.0
  %417 = vmatpush.msra.mxu0 0.0
  %418 = vmatpush.msra.mxu0 0.0
  %419 = vmatpush.msra.mxu0 0.0
  %420 = vmatpush.msra.mxu0 0.0
  %421 = vmatpush.msra.mxu0 %v401
  %422 = vmatmul.f32.gmra.mxu0 %v404
  %v423 = vpop.f32.mrf.mxu0
  %v424 = vadd.f32 0.0, %v423
  %425 = vdwg.mxu0
  %426 = vrot.lane.b32.xlu0 %v317, 64
  %v427 = vpop.permute.xlu0 %426
  %v430 = vsel %vm324, %v399, 0
  %432 = vmatpush.msra.mxu0 0.0
  %433 = vmatpush.msra.mxu0 0.0
  %434 = vmatpush.msra.mxu0 0.0
  %435 = vmatpush.msra.mxu0 0.0
  %436 = vmatpush.msra.mxu0 0.0
  %437 = vmatpush.msra.mxu0 0.0
  %438 = vmatpush.msra.mxu0 0.0
  %439 = vmatpush.msra.mxu0 0.0
  %440 = vmatpush.msra.mxu0 0.0
  %441 = vmatpush.msra.mxu0 0.0
  %442 = vmatpush.msra.mxu0 0.0
  %443 = vmatpush.msra.mxu0 0.0
  %444 = vmatpush.msra.mxu0 0.0
  %445 = vmatpush.msra.mxu0 0.0
  %446 = vmatpush.msra.mxu0 0.0
  %447 = vmatpush.msra.mxu0 %v427
  %448 = vmatmul.f32.gmra.mxu0 %v430
  %v449 = vpop.f32.mrf.mxu0
  %v450 = vadd.f32 0.0, %v449
  %451 = vdwg.mxu0
  %452 = vrot.lane.b32.xlu0 %v319, 120
  %v453 = vpop.permute.xlu0 %452
  %454 = vrot.lane.b32.xlu0 %v315, 88
  %v455 = vpop.permute.xlu0 %454
  %v456 = vsel %vm324, %v453, 0
  %v458 = vsel %vm324, %v455, 0
  %460 = vmatpush.xpose.msra.mxu0 0.0
  %461 = vmatpush.xpose.msra.mxu0 0.0
  %462 = vmatpush.xpose.msra.mxu0 0.0
  %463 = vmatpush.xpose.msra.mxu0 0.0
  %464 = vmatpush.xpose.msra.mxu0 0.0
  %465 = vmatpush.xpose.msra.mxu0 0.0
  %466 = vmatpush.xpose.msra.mxu0 0.0
  %467 = vmatpush.xpose.msra.mxu0 0.0
  %468 = vmatpush.xpose.msra.mxu0 0.0
  %469 = vmatpush.xpose.msra.mxu0 0.0
  %470 = vmatpush.xpose.msra.mxu0 0.0
  %471 = vmatpush.xpose.msra.mxu0 0.0
  %472 = vmatpush.xpose.msra.mxu0 0.0
  %473 = vmatpush.xpose.msra.mxu0 0.0
  %474 = vmatpush.xpose.msra.mxu0 0.0
  %475 = vmatpush.xpose.msra.mxu0 %v458
  %476 = vmatmul.f32.gmra.mxu0 %v456
  %v477 = vpop.f32.mrf.mxu0
  %v478 = vadd.f32 0.0, %v477
  %479 = vdwg.mxu0
  %480 = vrot.lane.b32.xlu0 %v320, 120
  %v481 = vpop.permute.xlu0 %480
  %482 = vrot.lane.b32.xlu0 %v317, 88
  %v483 = vpop.permute.xlu0 %482
  %v484 = vsel %vm324, %v481, 0
  %v486 = vsel %vm324, %v483, 0
  %488 = vmatpush.xpose.msra.mxu0 0.0
  %489 = vmatpush.xpose.msra.mxu0 0.0
  %490 = vmatpush.xpose.msra.mxu0 0.0
  %491 = vmatpush.xpose.msra.mxu0 0.0
  %492 = vmatpush.xpose.msra.mxu0 0.0
  %493 = vmatpush.xpose.msra.mxu0 0.0
  %494 = vmatpush.xpose.msra.mxu0 0.0
  %495 = vmatpush.xpose.msra.mxu0 0.0
  %496 = vmatpush.xpose.msra.mxu0 0.0
  %497 = vmatpush.xpose.msra.mxu0 0.0
  %498 = vmatpush.xpose.msra.mxu0 0.0
  %499 = vmatpush.xpose.msra.mxu0 0.0
  %500 = vmatpush.xpose.msra.mxu0 0.0
  %501 = vmatpush.xpose.msra.mxu0 0.0
  %502 = vmatpush.xpose.msra.mxu0 0.0
  %503 = vmatpush.xpose.msra.mxu0 %v486
  %504 = vmatmul.f32.gmra.mxu0 %v484
  %v505 = vpop.f32.mrf.mxu0
  %v506 = vadd.f32 0.0, %v505
  %507 = vdwg.mxu0
  %v508 = vsel %vm324, %v478, -inf
  %509 = vmax.xlane.f32.xlu0 %v508
  %v510 = vpop.xlane.xlu0 %509
  %v511 = vsel %vm324, %v506, -inf
  %512 = vmax.xlane.f32.xlu0 %v511
  %v513 = vpop.xlane.xlu0 %512
  %v514 = vsub.f32 %v478, %v510
  %v515 = vsub.f32 %v506, %v513
  %v516 = vmul.f32 %v514, 1.442695
  %v517 = vpow.pop %v516
  %v518 = vmul.f32 %v515, 1.442695
  %v519 = vpow.pop %v518
  %v520 = vsel %vm324, %v517, 0.0
  %521 = vadd.xlane.f32.xlu0 %v520
  %v522 = vpop.xlane.xlu0 %521
  %v523 = vsel %vm324, %v519, 0.0
  %524 = vadd.xlane.f32.xlu0 %v523
  %v525 = vpop.xlane.xlu0 %524
  %v526 = vrcp.pop %v522
  %v527 = vrcp.pop %v525
  %v528 = vmul.f32 %v517, %v526
  %v529 = vmul.f32 %v519, %v527
  %530 = vrot.lane.b32.xlu0 %v315, 56
  %v531 = vpop.permute.xlu0 %530
  %v534 = vsel %vm324, %v528, 0
  %536 = vmatpush.msra.mxu0 0.0
  %537 = vmatpush.msra.mxu0 0.0
  %538 = vmatpush.msra.mxu0 0.0
  %539 = vmatpush.msra.mxu0 0.0
  %540 = vmatpush.msra.mxu0 0.0
  %541 = vmatpush.msra.mxu0 0.0
  %542 = vmatpush.msra.mxu0 0.0
  %543 = vmatpush.msra.mxu0 0.0
  %544 = vmatpush.msra.mxu0 0.0
  %545 = vmatpush.msra.mxu0 0.0
  %546 = vmatpush.msra.mxu0 0.0
  %547 = vmatpush.msra.mxu0 0.0
  %548 = vmatpush.msra.mxu0 0.0
  %549 = vmatpush.msra.mxu0 0.0
  %550 = vmatpush.msra.mxu0 0.0
  %551 = vmatpush.msra.mxu0 %v531
  %552 = vmatmul.f32.gmra.mxu0 %v534
  %v553 = vpop.f32.mrf.mxu0
  %v554 = vadd.f32 0.0, %v553
  %555 = vdwg.mxu0
  %556 = vrot.lane.b32.xlu0 %v317, 56
  %v557 = vpop.permute.xlu0 %556
  %v560 = vsel %vm324, %v529, 0
  %562 = vmatpush.msra.mxu0 0.0
  %563 = vmatpush.msra.mxu0 0.0
  %564 = vmatpush.msra.mxu0 0.0
  %565 = vmatpush.msra.mxu0 0.0
  %566 = vmatpush.msra.mxu0 0.0
  %567 = vmatpush.msra.mxu0 0.0
  %568 = vmatpush.msra.mxu0 0.0
  %569 = vmatpush.msra.mxu0 0.0
  %570 = vmatpush.msra.mxu0 0.0
  %571 = vmatpush.msra.mxu0 0.0
  %572 = vmatpush.msra.mxu0 0.0
  %573 = vmatpush.msra.mxu0 0.0
  %574 = vmatpush.msra.mxu0 0.0
  %575 = vmatpush.msra.mxu0 0.0
  %576 = vmatpush.msra.mxu0 0.0
  %577 = vmatpush.msra.mxu0 %v557
  %578 = vmatmul.f32.gmra.mxu0 %v560
  %v579 = vpop.f32.mrf.mxu0
  %v580 = vadd.f32 0.0, %v579
  %581 = vdwg.mxu0
  %582 = vrot.lane.b32.xlu0 %v319, 112
  %v583 = vpop.permute.xlu0 %582
  %584 = vrot.lane.b32.xlu0 %v315, 80
  %v585 = vpop.permute.xlu0 %584
  %v586 = vsel %vm324, %v583, 0
  %v588 = vsel %vm324, %v585, 0
  %590 = vmatpush.xpose.msra.mxu0 0.0
  %591 = vmatpush.xpose.msra.mxu0 0.0
  %592 = vmatpush.xpose.msra.mxu0 0.0
  %593 = vmatpush.xpose.msra.mxu0 0.0
  %594 = vmatpush.xpose.msra.mxu0 0.0
  %595 = vmatpush.xpose.msra.mxu0 0.0
  %596 = vmatpush.xpose.msra.mxu0 0.0
  %597 = vmatpush.xpose.msra.mxu0 0.0
  %598 = vmatpush.xpose.msra.mxu0 0.0
  %599 = vmatpush.xpose.msra.mxu0 0.0
  %600 = vmatpush.xpose.msra.mxu0 0.0
  %601 = vmatpush.xpose.msra.mxu0 0.0
  %602 = vmatpush.xpose.msra.mxu0 0.0
  %603 = vmatpush.xpose.msra.mxu0 0.0
  %604 = vmatpush.xpose.msra.mxu0 0.0
  %605 = vmatpush.xpose.msra.mxu0 %v588
  %606 = vmatmul.f32.gmra.mxu0 %v586
  %v607 = vpop.f32.mrf.mxu0
  %v608 = vadd.f32 0.0, %v607
  %609 = vdwg.mxu0
  %610 = vrot.lane.b32.xlu0 %v320, 112
  %v611 = vpop.permute.xlu0 %610
  %612 = vrot.lane.b32.xlu0 %v317, 80
  %v613 = vpop.permute.xlu0 %612
  %v614 = vsel %vm324, %v611, 0
  %v616 = vsel %vm324, %v613, 0
  %618 = vmatpush.xpose.msra.mxu0 0.0
  %619 = vmatpush.xpose.msra.mxu0 0.0
  %620 = vmatpush.xpose.msra.mxu0 0.0
  %621 = vmatpush.xpose.msra.mxu0 0.0
  %622 = vmatpush.xpose.msra.mxu0 0.0
  %623 = vmatpush.xpose.msra.mxu0 0.0
  %624 = vmatpush.xpose.msra.mxu0 0.0
  %625 = vmatpush.xpose.msra.mxu0 0.0
  %626 = vmatpush.xpose.msra.mxu0 0.0
  %627 = vmatpush.xpose.msra.mxu0 0.0
  %628 = vmatpush.xpose.msra.mxu0 0.0
  %629 = vmatpush.xpose.msra.mxu0 0.0
  %630 = vmatpush.xpose.msra.mxu0 0.0
  %631 = vmatpush.xpose.msra.mxu0 0.0
  %632 = vmatpush.xpose.msra.mxu0 0.0
  %633 = vmatpush.xpose.msra.mxu0 %v616
  %634 = vmatmul.f32.gmra.mxu0 %v614
  %v635 = vpop.f32.mrf.mxu0
  %v636 = vadd.f32 0.0, %v635
  %637 = vdwg.mxu0
  %v638 = vsel %vm324, %v608, -inf
  %639 = vmax.xlane.f32.xlu0 %v638
  %v640 = vpop.xlane.xlu0 %639
  %v641 = vsel %vm324, %v636, -inf
  %642 = vmax.xlane.f32.xlu0 %v641
  %v643 = vpop.xlane.xlu0 %642
  %v644 = vsub.f32 %v608, %v640
  %v645 = vsub.f32 %v636, %v643
  %v646 = vmul.f32 %v644, 1.442695
  %v647 = vpow.pop %v646
  %v648 = vmul.f32 %v645, 1.442695
  %v649 = vpow.pop %v648
  %v650 = vsel %vm324, %v647, 0.0
  %651 = vadd.xlane.f32.xlu0 %v650
  %v652 = vpop.xlane.xlu0 %651
  %v653 = vsel %vm324, %v649, 0.0
  %654 = vadd.xlane.f32.xlu0 %v653
  %v655 = vpop.xlane.xlu0 %654
  %v656 = vrcp.pop %v652
  %v657 = vrcp.pop %v655
  %v658 = vmul.f32 %v647, %v656
  %v659 = vmul.f32 %v649, %v657
  %660 = vrot.lane.b32.xlu0 %v315, 48
  %v661 = vpop.permute.xlu0 %660
  %v664 = vsel %vm324, %v658, 0
  %666 = vmatpush.msra.mxu0 0.0
  %667 = vmatpush.msra.mxu0 0.0
  %668 = vmatpush.msra.mxu0 0.0
  %669 = vmatpush.msra.mxu0 0.0
  %670 = vmatpush.msra.mxu0 0.0
  %671 = vmatpush.msra.mxu0 0.0
  %672 = vmatpush.msra.mxu0 0.0
  %673 = vmatpush.msra.mxu0 0.0
  %674 = vmatpush.msra.mxu0 0.0
  %675 = vmatpush.msra.mxu0 0.0
  %676 = vmatpush.msra.mxu0 0.0
  %677 = vmatpush.msra.mxu0 0.0
  %678 = vmatpush.msra.mxu0 0.0
  %679 = vmatpush.msra.mxu0 0.0
  %680 = vmatpush.msra.mxu0 0.0
  %681 = vmatpush.msra.mxu0 %v661
  %682 = vmatmul.f32.gmra.mxu0 %v664
  %v683 = vpop.f32.mrf.mxu0
  %v684 = vadd.f32 0.0, %v683
  %685 = vdwg.mxu0
  %686 = vrot.lane.b32.xlu0 %v317, 48
  %v687 = vpop.permute.xlu0 %686
  %v690 = vsel %vm324, %v659, 0
  %692 = vmatpush.msra.mxu0 0.0
  %693 = vmatpush.msra.mxu0 0.0
  %694 = vmatpush.msra.mxu0 0.0
  %695 = vmatpush.msra.mxu0 0.0
  %696 = vmatpush.msra.mxu0 0.0
  %697 = vmatpush.msra.mxu0 0.0
  %698 = vmatpush.msra.mxu0 0.0
  %699 = vmatpush.msra.mxu0 0.0
  %700 = vmatpush.msra.mxu0 0.0
  %701 = vmatpush.msra.mxu0 0.0
  %702 = vmatpush.msra.mxu0 0.0
  %703 = vmatpush.msra.mxu0 0.0
  %704 = vmatpush.msra.mxu0 0.0
  %705 = vmatpush.msra.mxu0 0.0
  %706 = vmatpush.msra.mxu0 0.0
  %707 = vmatpush.msra.mxu0 %v687
  %708 = vmatmul.f32.gmra.mxu0 %v690
  %v709 = vpop.f32.mrf.mxu0
  %v710 = vadd.f32 0.0, %v709
  %711 = vdwg.mxu0
  %712 = vrot.lane.b32.xlu0 %v319, 104
  %v713 = vpop.permute.xlu0 %712
  %714 = vrot.lane.b32.xlu0 %v315, 72
  %v715 = vpop.permute.xlu0 %714
  %v716 = vsel %vm324, %v713, 0
  %v718 = vsel %vm324, %v715, 0
  %720 = vmatpush.xpose.msra.mxu0 0.0
  %721 = vmatpush.xpose.msra.mxu0 0.0
  %722 = vmatpush.xpose.msra.mxu0 0.0
  %723 = vmatpush.xpose.msra.mxu0 0.0
  %724 = vmatpush.xpose.msra.mxu0 0.0
  %725 = vmatpush.xpose.msra.mxu0 0.0
  %726 = vmatpush.xpose.msra.mxu0 0.0
  %727 = vmatpush.xpose.msra.mxu0 0.0
  %728 = vmatpush.xpose.msra.mxu0 0.0
  %729 = vmatpush.xpose.msra.mxu0 0.0
  %730 = vmatpush.xpose.msra.mxu0 0.0
  %731 = vmatpush.xpose.msra.mxu0 0.0
  %732 = vmatpush.xpose.msra.mxu0 0.0
  %733 = vmatpush.xpose.msra.mxu0 0.0
  %734 = vmatpush.xpose.msra.mxu0 0.0
  %735 = vmatpush.xpose.msra.mxu0 %v718
  %736 = vmatmul.f32.gmra.mxu0 %v716
  %v737 = vpop.f32.mrf.mxu0
  %v738 = vadd.f32 0.0, %v737
  %739 = vdwg.mxu0
  %740 = vrot.lane.b32.xlu0 %v320, 104
  %v741 = vpop.permute.xlu0 %740
  %742 = vrot.lane.b32.xlu0 %v317, 72
  %v743 = vpop.permute.xlu0 %742
  %v744 = vsel %vm324, %v741, 0
  %v746 = vsel %vm324, %v743, 0
  %748 = vmatpush.xpose.msra.mxu0 0.0
  %749 = vmatpush.xpose.msra.mxu0 0.0
  %750 = vmatpush.xpose.msra.mxu0 0.0
  %751 = vmatpush.xpose.msra.mxu0 0.0
  %752 = vmatpush.xpose.msra.mxu0 0.0
  %753 = vmatpush.xpose.msra.mxu0 0.0
  %754 = vmatpush.xpose.msra.mxu0 0.0
  %755 = vmatpush.xpose.msra.mxu0 0.0
  %756 = vmatpush.xpose.msra.mxu0 0.0
  %757 = vmatpush.xpose.msra.mxu0 0.0
  %758 = vmatpush.xpose.msra.mxu0 0.0
  %759 = vmatpush.xpose.msra.mxu0 0.0
  %760 = vmatpush.xpose.msra.mxu0 0.0
  %761 = vmatpush.xpose.msra.mxu0 0.0
  %762 = vmatpush.xpose.msra.mxu0 0.0
  %763 = vmatpush.xpose.msra.mxu0 %v746
  %764 = vmatmul.f32.gmra.mxu0 %v744
  %v765 = vpop.f32.mrf.mxu0
  %v766 = vadd.f32 0.0, %v765
  %767 = vdwg.mxu0
  %v768 = vsel %vm324, %v738, -inf
  %769 = vmax.xlane.f32.xlu0 %v768
  %v770 = vpop.xlane.xlu0 %769
  %v771 = vsel %vm324, %v766, -inf
  %772 = vmax.xlane.f32.xlu0 %v771
  %v773 = vpop.xlane.xlu0 %772
  %v774 = vsub.f32 %v738, %v770
  %v775 = vsub.f32 %v766, %v773
  %v776 = vmul.f32 %v774, 1.442695
  %v777 = vpow.pop %v776
  %v778 = vmul.f32 %v775, 1.442695
  %v779 = vpow.pop %v778
  %v780 = vsel %vm324, %v777, 0.0
  %781 = vadd.xlane.f32.xlu0 %v780
  %v782 = vpop.xlane.xlu0 %781
  %v783 = vsel %vm324, %v779, 0.0
  %784 = vadd.xlane.f32.xlu0 %v783
  %v785 = vpop.xlane.xlu0 %784
  %v786 = vrcp.pop %v782
  %v787 = vrcp.pop %v785
  %v788 = vmul.f32 %v777, %v786
  %v789 = vmul.f32 %v779, %v787
  %790 = vrot.lane.b32.xlu0 %v315, 40
  %v791 = vpop.permute.xlu0 %790
  %v794 = vsel %vm324, %v788, 0
  %796 = vmatpush.msra.mxu0 0.0
  %797 = vmatpush.msra.mxu0 0.0
  %798 = vmatpush.msra.mxu0 0.0
  %799 = vmatpush.msra.mxu0 0.0
  %800 = vmatpush.msra.mxu0 0.0
  %801 = vmatpush.msra.mxu0 0.0
  %802 = vmatpush.msra.mxu0 0.0
  %803 = vmatpush.msra.mxu0 0.0
  %804 = vmatpush.msra.mxu0 0.0
  %805 = vmatpush.msra.mxu0 0.0
  %806 = vmatpush.msra.mxu0 0.0
  %807 = vmatpush.msra.mxu0 0.0
  %808 = vmatpush.msra.mxu0 0.0
  %809 = vmatpush.msra.mxu0 0.0
  %810 = vmatpush.msra.mxu0 0.0
  %811 = vmatpush.msra.mxu0 %v791
  %812 = vmatmul.f32.gmra.mxu0 %v794
  %v813 = vpop.f32.mrf.mxu0
  %v814 = vadd.f32 0.0, %v813
  %815 = vdwg.mxu0
  %816 = vrot.lane.b32.xlu0 %v317, 40
  %v817 = vpop.permute.xlu0 %816
  %v820 = vsel %vm324, %v789, 0
  %822 = vmatpush.msra.mxu0 0.0
  %823 = vmatpush.msra.mxu0 0.0
  %824 = vmatpush.msra.mxu0 0.0
  %825 = vmatpush.msra.mxu0 0.0
  %826 = vmatpush.msra.mxu0 0.0
  %827 = vmatpush.msra.mxu0 0.0
  %828 = vmatpush.msra.mxu0 0.0
  %829 = vmatpush.msra.mxu0 0.0
  %830 = vmatpush.msra.mxu0 0.0
  %831 = vmatpush.msra.mxu0 0.0
  %832 = vmatpush.msra.mxu0 0.0
  %833 = vmatpush.msra.mxu0 0.0
  %834 = vmatpush.msra.mxu0 0.0
  %835 = vmatpush.msra.mxu0 0.0
  %836 = vmatpush.msra.mxu0 0.0
  %837 = vmatpush.msra.mxu0 %v817
  %838 = vmatmul.f32.gmra.mxu0 %v820
  %v839 = vpop.f32.mrf.mxu0
  %v840 = vadd.f32 0.0, %v839
  %841 = vdwg.mxu0
  %844 = vrot.lane.b32.xlu0 %v554, 8
  %v845 = vpop.permute.xlu0 %844
  %846 = vrot.lane.b32.xlu0 %v580, 8
  %v847 = vpop.permute.xlu0 %846
  %852 = vrot.lane.b32.xlu0 %v684, 16
  %v853 = vpop.permute.xlu0 %852
  %854 = vrot.lane.b32.xlu0 %v710, 16
  %v855 = vpop.permute.xlu0 %854
  %860 = vrot.lane.b32.xlu0 %v814, 24
  %v861 = vpop.permute.xlu0 %860
  %862 = vrot.lane.b32.xlu0 %v840, 24
  %v863 = vpop.permute.xlu0 %862
  %v866 = vsel %vm324, %v424, %v845
  %v867 = vsel %vm324, %v450, %v847
  %vm868 = vcmask 130048
  %v869 = vsel %vm868, %v866, %v853
  %v870 = vsel %vm868, %v867, %v855
  %vm871 = vcmask 195584
  %v872 = vsel %vm871, %v869, %v861
  %v873 = vsel %vm871, %v870, %v863
  %v874 = vpack.c.bf16 %v873, %v872
  %v875 = vld [vmem:[%s17] sm:$0xf]
  %v876 = vld [vmem:[%s17 + $0x4] sm:$0xf]
  %v877 = vld [vmem:[%s17 + $0x8] sm:$0xf]
  %v878 = vld [vmem:[%s17 + $0xc] sm:$0xf]
  %v879 = vld [vmem:[%s19] sm:$0x1]
  %v881 = vperm.slane %v879, 0
  %v887 = vunpack.c.l.b16 %v875
  %v888 = vunpack.c.l.b16 %v876
  %v889 = vunpack.c.l.b16 %v877
  %v890 = vunpack.c.l.b16 %v878
  %v891 = vpack.c.b16 %v888, %v887
  %v892 = vpack.c.b16 %v890, %v889
  %v896 = vsel %vm219, %v874, 0
  %898 = vmatpush.bf16.msra.mxu0 0
  %899 = vmatpush.bf16.msra.mxu0 0
  %900 = vmatpush.bf16.msra.mxu0 0
  %901 = vmatpush.bf16.msra.mxu0 0
  %902 = vmatpush.bf16.msra.mxu0 0
  %903 = vmatpush.bf16.msra.mxu0 0
  %904 = vmatpush.bf16.msra.mxu0 %v892
  %905 = vmatpush.bf16.msra.mxu0 %v891
  %906 = vmatmul.bf16.gmra.mxu0 %v896
  %v907 = vpop.f32.mrf.mxu0
  %v908 = vadd.f32 %v881, %v907
  %v909 = vpop.f32.mrf.mxu0
  %v910 = vadd.f32 %v881, %v909
  %911 = vdwg.mxu0
  %v912 = vadd.f32 %v908, %v279
  %v913 = vadd.f32 %v910, %v280
  %v914 = vld [vmem:[%s21] sm:$0x1]
  %v915 = vld [vmem:[%s23] sm:$0x1]
  %v916 = vsel %vm219, %v912, 0.0
  %917 = vadd.xlane.f32.xlu0 %v916
  %v918 = vpop.xlane.xlu0 %917
  %v919 = vsel %vm219, %v913, 0.0
  %920 = vadd.xlane.f32.xlu0 %v919
  %v921 = vpop.xlane.xlu0 %920
  %v922 = vmul.f32 %v918, %v232
  %v923 = vmul.f32 %v921, %v232
  %v924 = vsub.f32 %v912, %v922
  %v925 = vsub.f32 %v913, %v923
  %v926 = vmul.f32 %v924, %v924
  %v927 = vmul.f32 %v925, %v925
  %v928 = vsel %vm219, %v926, 0.0
  %929 = vadd.xlane.f32.xlu0 %v928
  %v930 = vpop.xlane.xlu0 %929
  %v931 = vsel %vm219, %v927, 0.0
  %932 = vadd.xlane.f32.xlu0 %v931
  %v933 = vpop.xlane.xlu0 %932
  %v934 = vmul.f32 %v930, %v232
  %v935 = vmul.f32 %v933, %v232
  %v936 = vadd.f32 %v934, 1e-12
  %v937 = vadd.f32 %v935, 1e-12
  %v938 = vrsqrt.pop %v936
  %v939 = vmul.f32 %v938, %v936
  %v940 = vmul.f32 %v939, %v938
  %v941 = vmul.f32 0.5, %v940
  %v942 = vsub.f32 1.5, %v941
  %v943 = vmul.f32 %v938, %v942
  %vm944 = vweird.f32 %v936
  %vm945 = vweird.f32 %v938
  %vm946 = vmor %vm944, %vm945
  %v947 = vsel %vm946, %v938, %v943
  %v948 = vrsqrt.pop %v937
  %v949 = vmul.f32 %v948, %v937
  %v950 = vmul.f32 %v949, %v948
  %v951 = vmul.f32 0.5, %v950
  %v952 = vsub.f32 1.5, %v951
  %v953 = vmul.f32 %v948, %v952
  %vm954 = vweird.f32 %v937
  %vm955 = vweird.f32 %v948
  %vm956 = vmor %vm954, %vm955
  %v957 = vsel %vm956, %v948, %v953
  %v958 = vmul.f32 %v924, %v947
  %v959 = vmul.f32 %v925, %v957
  %v961 = vperm.slane %v914, 0
  %v963 = vmul.f32 %v958, %v961
  %v964 = vmul.f32 %v959, %v961
  %v966 = vperm.slane %v915, 0
  %v968 = vadd.f32 %v963, %v966
  %v969 = vadd.f32 %v964, %v966
  %v970 = vpack.c.bf16 %v969, %v968
  %v971 = vld [vmem:[%s25] sm:$0xf]
  %v972 = vld [vmem:[%s25 + $0x4] sm:$0xf]
  %v973 = vld [vmem:[%s25 + $0x8] sm:$0xf]
  %v974 = vld [vmem:[%s25 + $0xc] sm:$0xf]
  %v975 = vld [vmem:[%s27] sm:$0x1]
  %v977 = vperm.slane %v975, 0
  %v983 = vunpack.c.l.b16 %v971
  %v984 = vunpack.c.l.b16 %v972
  %v985 = vunpack.c.l.b16 %v973
  %v986 = vunpack.c.l.b16 %v974
  %v987 = vpack.c.b16 %v984, %v983
  %v988 = vpack.c.b16 %v986, %v985
  %v992 = vsel %vm219, %v970, 0
  %994 = vmatpush.bf16.msra.mxu0 0
  %995 = vmatpush.bf16.msra.mxu0 0
  %996 = vmatpush.bf16.msra.mxu0 0
  %997 = vmatpush.bf16.msra.mxu0 0
  %998 = vmatpush.bf16.msra.mxu0 0
  %999 = vmatpush.bf16.msra.mxu0 0
  %1000 = vmatpush.bf16.msra.mxu0 %v988
  %1001 = vmatpush.bf16.msra.mxu0 %v987
  %1002 = vmatmul.bf16.gmra.mxu0 %v992
  %v1003 = vpop.f32.mrf.mxu0
  %v1004 = vadd.f32 %v977, %v1003
  %v1005 = vpop.f32.mrf.mxu0
  %v1006 = vadd.f32 %v977, %v1005
  %1007 = vdwg.mxu0
  %v1008 = vmul.f32 %v1004, 0.5
  %v1009 = vmul.f32 %v1006, 0.5
  %v1010 = vmul.f32 %v1004, 0.044715
  %v1011 = vmul.f32 %v1006, 0.044715
  %v1012 = vmul.f32 %v1010, %v1004
  %v1013 = vmul.f32 %v1011, %v1006
  %v1014 = vmul.f32 %v1012, %v1004
  %v1015 = vmul.f32 %v1013, %v1006
  %v1016 = vadd.f32 %v1004, %v1014
  %v1017 = vadd.f32 %v1006, %v1015
  %v1018 = vmul.f32 %v1016, 0.7978846
  %v1019 = vmul.f32 %v1017, 0.7978846
  %v1020 = vtanh.pop %v1018
  %v1021 = vtanh.pop %v1019
  %v1022 = vadd.f32 %v1020, 1.0
  %v1023 = vadd.f32 %v1021, 1.0
  %v1024 = vmul.f32 %v1008, %v1022
  %v1025 = vmul.f32 %v1009, %v1023
  %v1026 = vpack.c.bf16 %v1025, %v1024
  %v1027 = vld [vmem:[%s29] sm:$0xf]
  %v1028 = vld [vmem:[%s29 + $0x4] sm:$0xf]
  %v1029 = vld [vmem:[%s29 + $0x8] sm:$0xf]
  %v1030 = vld [vmem:[%s29 + $0xc] sm:$0xf]
  %v1031 = vld [vmem:[%s29 + $0x10] sm:$0xf]
  %v1032 = vld [vmem:[%s29 + $0x14] sm:$0xf]
  %v1033 = vld [vmem:[%s29 + $0x18] sm:$0xf]
  %v1034 = vld [vmem:[%s29 + $0x1c] sm:$0xf]
  %v1035 = vld [vmem:[%s31] sm:$0x1]
  %v1037 = vperm.slane %v1035, 0
  %v1047 = vunpack.c.l.b16 %v1027
  %v1048 = vunpack.c.l.b16 %v1028
  %v1049 = vunpack.c.l.b16 %v1029
  %v1050 = vunpack.c.l.b16 %v1030
  %v1051 = vunpack.c.l.b16 %v1031
  %v1052 = vunpack.c.l.b16 %v1032
  %v1053 = vunpack.c.l.b16 %v1033
  %v1054 = vunpack.c.l.b16 %v1034
  %v1055 = vpack.c.b16 %v1048, %v1047
  %v1056 = vpack.c.b16 %v1050, %v1049
  %v1057 = vpack.c.b16 %v1052, %v1051
  %v1058 = vpack.c.b16 %v1054, %v1053
  %vm1063 = vcmask 523264
  %v1065 = vsel %vm1063, %v1026, 0
  %1067 = vmatpush.bf16.msra.mxu0 0
  %1068 = vmatpush.bf16.msra.mxu0 0
  %1069 = vmatpush.bf16.msra.mxu0 0
  %1070 = vmatpush.bf16.msra.mxu0 0
  %1071 = vmatpush.bf16.msra.mxu0 %v1058
  %1072 = vmatpush.bf16.msra.mxu0 %v1057
  %1073 = vmatpush.bf16.msra.mxu0 %v1056
  %1074 = vmatpush.bf16.msra.mxu0 %v1055
  %1075 = vmatmul.bf16.gmra.mxu0 %v1065
  %v1076 = vpop.f32.mrf.mxu0
  %v1077 = vadd.f32 %v1037, %v1076
  %v1078 = vpop.f32.mrf.mxu0
  %v1079 = vadd.f32 %v1037, %v1078
  %1080 = vdwg.mxu0
  %v1081 = vadd.f32 %v1077, %v968
  %v1082 = vadd.f32 %v1079, %v969
  %v1083 = vld [vmem:[%s33] sm:$0x1]
  %v1084 = vld [vmem:[%s35] sm:$0x1]
  %v1085 = vsel %vm219, %v1081, 0.0
  %1086 = vadd.xlane.f32.xlu0 %v1085
  %v1087 = vpop.xlane.xlu0 %1086
  %v1088 = vsel %vm219, %v1082, 0.0
  %1089 = vadd.xlane.f32.xlu0 %v1088
  %v1090 = vpop.xlane.xlu0 %1089
  %v1091 = vmul.f32 %v1087, %v232
  %v1092 = vmul.f32 %v1090, %v232
  %v1093 = vsub.f32 %v1081, %v1091
  %v1094 = vsub.f32 %v1082, %v1092
  %v1095 = vmul.f32 %v1093, %v1093
  %v1096 = vmul.f32 %v1094, %v1094
  %v1097 = vsel %vm219, %v1095, 0.0
  %1098 = vadd.xlane.f32.xlu0 %v1097
  %v1099 = vpop.xlane.xlu0 %1098
  %v1100 = vsel %vm219, %v1096, 0.0
  %1101 = vadd.xlane.f32.xlu0 %v1100
  %v1102 = vpop.xlane.xlu0 %1101
  %v1103 = vmul.f32 %v1099, %v232
  %v1104 = vmul.f32 %v1102, %v232
  %v1105 = vadd.f32 %v1103, 1e-12
  %v1106 = vadd.f32 %v1104, 1e-12
  %v1107 = vrsqrt.pop %v1105
  %v1108 = vmul.f32 %v1107, %v1105
  %v1109 = vmul.f32 %v1108, %v1107
  %v1110 = vmul.f32 0.5, %v1109
  %v1111 = vsub.f32 1.5, %v1110
  %v1112 = vmul.f32 %v1107, %v1111
  %vm1113 = vweird.f32 %v1105
  %vm1114 = vweird.f32 %v1107
  %vm1115 = vmor %vm1113, %vm1114
  %v1116 = vsel %vm1115, %v1107, %v1112
  %v1117 = vrsqrt.pop %v1106
  %v1118 = vmul.f32 %v1117, %v1106
  %v1119 = vmul.f32 %v1118, %v1117
  %v1120 = vmul.f32 0.5, %v1119
  %v1121 = vsub.f32 1.5, %v1120
  %v1122 = vmul.f32 %v1117, %v1121
  %vm1123 = vweird.f32 %v1106
  %vm1124 = vweird.f32 %v1117
  %vm1125 = vmor %vm1123, %vm1124
  %v1126 = vsel %vm1125, %v1117, %v1122
  %v1127 = vmul.f32 %v1093, %v1116
  %v1128 = vmul.f32 %v1094, %v1126
  %v1130 = vperm.slane %v1083, 0
  %v1132 = vmul.f32 %v1127, %v1130
  %v1133 = vmul.f32 %v1128, %v1130
  %v1135 = vperm.slane %v1084, 0
  %v1137 = vadd.f32 %v1132, %v1135
  %v1138 = vadd.f32 %v1133, %v1135
  %v1139 = vpack.c.bf16 %v1138, %v1137
  %v1140 = vld [vmem:[%s37] sm:$0xf]
  %v1141 = vld [vmem:[%s37 + $0x4] sm:$0xf]
  %v1142 = vld [vmem:[%s37 + $0x8] sm:$0xf]
  %v1143 = vld [vmem:[%s37 + $0xc] sm:$0xf]
  %v1144 = vld [vmem:[%s39] sm:$0x1]
  %v1146 = vperm.slane %v1144, 0
  %v1152 = vunpack.c.l.b16 %v1140
  %v1153 = vunpack.c.l.b16 %v1141
  %v1154 = vunpack.c.l.b16 %v1142
  %v1155 = vunpack.c.l.b16 %v1143
  %v1156 = vpack.c.b16 %v1153, %v1152
  %v1157 = vpack.c.b16 %v1155, %v1154
  %v1161 = vsel %vm219, %v1139, 0
  %1163 = vmatpush.bf16.msra.mxu0 0
  %1164 = vmatpush.bf16.msra.mxu0 0
  %1165 = vmatpush.bf16.msra.mxu0 0
  %1166 = vmatpush.bf16.msra.mxu0 0
  %1167 = vmatpush.bf16.msra.mxu0 0
  %1168 = vmatpush.bf16.msra.mxu0 0
  %1169 = vmatpush.bf16.msra.mxu0 %v1157
  %1170 = vmatpush.bf16.msra.mxu0 %v1156
  %1171 = vmatmul.bf16.gmra.mxu0 %v1161
  %v1172 = vpop.f32.mrf.mxu0
  %v1173 = vadd.f32 %v1146, %v1172
  %v1174 = vpop.f32.mrf.mxu0
  %v1175 = vadd.f32 %v1146, %v1174
  %1176 = vdwg.mxu0
  %v1177 = vmul.f32 %v1173, 0.35355338
  %v1178 = vmul.f32 %v1175, 0.35355338
  %1180 = vrot.lane.b32.xlu0 %v1173, 96
  %v1181 = vpop.permute.xlu0 %1180
  %v1183 = vsel %vm324, %v1177, 0
  %v1185 = vsel %vm324, %v1181, 0
  %1187 = vmatpush.xpose.msra.mxu0 0.0
  %1188 = vmatpush.xpose.msra.mxu0 0.0
  %1189 = vmatpush.xpose.msra.mxu0 0.0
  %1190 = vmatpush.xpose.msra.mxu0 0.0
  %1191 = vmatpush.xpose.msra.mxu0 0.0
  %1192 = vmatpush.xpose.msra.mxu0 0.0
  %1193 = vmatpush.xpose.msra.mxu0 0.0
  %1194 = vmatpush.xpose.msra.mxu0 0.0
  %1195 = vmatpush.xpose.msra.mxu0 0.0
  %1196 = vmatpush.xpose.msra.mxu0 0.0
  %1197 = vmatpush.xpose.msra.mxu0 0.0
  %1198 = vmatpush.xpose.msra.mxu0 0.0
  %1199 = vmatpush.xpose.msra.mxu0 0.0
  %1200 = vmatpush.xpose.msra.mxu0 0.0
  %1201 = vmatpush.xpose.msra.mxu0 0.0
  %1202 = vmatpush.xpose.msra.mxu0 %v1185
  %1203 = vmatmul.f32.gmra.mxu0 %v1183
  %v1204 = vpop.f32.mrf.mxu0
  %v1205 = vadd.f32 0.0, %v1204
  %1206 = vdwg.mxu0
  %1208 = vrot.lane.b32.xlu0 %v1175, 96
  %v1209 = vpop.permute.xlu0 %1208
  %v1211 = vsel %vm324, %v1178, 0
  %v1213 = vsel %vm324, %v1209, 0
  %1215 = vmatpush.xpose.msra.mxu0 0.0
  %1216 = vmatpush.xpose.msra.mxu0 0.0
  %1217 = vmatpush.xpose.msra.mxu0 0.0
  %1218 = vmatpush.xpose.msra.mxu0 0.0
  %1219 = vmatpush.xpose.msra.mxu0 0.0
  %1220 = vmatpush.xpose.msra.mxu0 0.0
  %1221 = vmatpush.xpose.msra.mxu0 0.0
  %1222 = vmatpush.xpose.msra.mxu0 0.0
  %1223 = vmatpush.xpose.msra.mxu0 0.0
  %1224 = vmatpush.xpose.msra.mxu0 0.0
  %1225 = vmatpush.xpose.msra.mxu0 0.0
  %1226 = vmatpush.xpose.msra.mxu0 0.0
  %1227 = vmatpush.xpose.msra.mxu0 0.0
  %1228 = vmatpush.xpose.msra.mxu0 0.0
  %1229 = vmatpush.xpose.msra.mxu0 0.0
  %1230 = vmatpush.xpose.msra.mxu0 %v1213
  %1231 = vmatmul.f32.gmra.mxu0 %v1211
  %v1232 = vpop.f32.mrf.mxu0
  %v1233 = vadd.f32 0.0, %v1232
  %1234 = vdwg.mxu0
  %v1235 = vsel %vm324, %v1205, -inf
  %1236 = vmax.xlane.f32.xlu0 %v1235
  %v1237 = vpop.xlane.xlu0 %1236
  %v1238 = vsel %vm324, %v1233, -inf
  %1239 = vmax.xlane.f32.xlu0 %v1238
  %v1240 = vpop.xlane.xlu0 %1239
  %v1241 = vsub.f32 %v1205, %v1237
  %v1242 = vsub.f32 %v1233, %v1240
  %v1243 = vmul.f32 %v1241, 1.442695
  %v1244 = vpow.pop %v1243
  %v1245 = vmul.f32 %v1242, 1.442695
  %v1246 = vpow.pop %v1245
  %v1247 = vsel %vm324, %v1244, 0.0
  %1248 = vadd.xlane.f32.xlu0 %v1247
  %v1249 = vpop.xlane.xlu0 %1248
  %v1250 = vsel %vm324, %v1246, 0.0
  %1251 = vadd.xlane.f32.xlu0 %v1250
  %v1252 = vpop.xlane.xlu0 %1251
  %v1253 = vrcp.pop %v1249
  %v1254 = vrcp.pop %v1252
  %v1255 = vmul.f32 %v1244, %v1253
  %v1256 = vmul.f32 %v1246, %v1254
  %1257 = vrot.lane.b32.xlu0 %v1173, 64
  %v1258 = vpop.permute.xlu0 %1257
  %v1261 = vsel %vm324, %v1255, 0
  %1263 = vmatpush.msra.mxu0 0.0
  %1264 = vmatpush.msra.mxu0 0.0
  %1265 = vmatpush.msra.mxu0 0.0
  %1266 = vmatpush.msra.mxu0 0.0
  %1267 = vmatpush.msra.mxu0 0.0
  %1268 = vmatpush.msra.mxu0 0.0
  %1269 = vmatpush.msra.mxu0 0.0
  %1270 = vmatpush.msra.mxu0 0.0
  %1271 = vmatpush.msra.mxu0 0.0
  %1272 = vmatpush.msra.mxu0 0.0
  %1273 = vmatpush.msra.mxu0 0.0
  %1274 = vmatpush.msra.mxu0 0.0
  %1275 = vmatpush.msra.mxu0 0.0
  %1276 = vmatpush.msra.mxu0 0.0
  %1277 = vmatpush.msra.mxu0 0.0
  %1278 = vmatpush.msra.mxu0 %v1258
  %1279 = vmatmul.f32.gmra.mxu0 %v1261
  %v1280 = vpop.f32.mrf.mxu0
  %v1281 = vadd.f32 0.0, %v1280
  %1282 = vdwg.mxu0
  %1283 = vrot.lane.b32.xlu0 %v1175, 64
  %v1284 = vpop.permute.xlu0 %1283
  %v1287 = vsel %vm324, %v1256, 0
  %1289 = vmatpush.msra.mxu0 0.0
  %1290 = vmatpush.msra.mxu0 0.0
  %1291 = vmatpush.msra.mxu0 0.0
  %1292 = vmatpush.msra.mxu0 0.0
  %1293 = vmatpush.msra.mxu0 0.0
  %1294 = vmatpush.msra.mxu0 0.0
  %1295 = vmatpush.msra.mxu0 0.0
  %1296 = vmatpush.msra.mxu0 0.0
  %1297 = vmatpush.msra.mxu0 0.0
  %1298 = vmatpush.msra.mxu0 0.0
  %1299 = vmatpush.msra.mxu0 0.0
  %1300 = vmatpush.msra.mxu0 0.0
  %1301 = vmatpush.msra.mxu0 0.0
  %1302 = vmatpush.msra.mxu0 0.0
  %1303 = vmatpush.msra.mxu0 0.0
  %1304 = vmatpush.msra.mxu0 %v1284
  %1305 = vmatmul.f32.gmra.mxu0 %v1287
  %v1306 = vpop.f32.mrf.mxu0
  %v1307 = vadd.f32 0.0, %v1306
  %1308 = vdwg.mxu0
  %1309 = vrot.lane.b32.xlu0 %v1177, 120
  %v1310 = vpop.permute.xlu0 %1309
  %1311 = vrot.lane.b32.xlu0 %v1173, 88
  %v1312 = vpop.permute.xlu0 %1311
  %v1313 = vsel %vm324, %v1310, 0
  %v1315 = vsel %vm324, %v1312, 0
  %1317 = vmatpush.xpose.msra.mxu0 0.0
  %1318 = vmatpush.xpose.msra.mxu0 0.0
  %1319 = vmatpush.xpose.msra.mxu0 0.0
  %1320 = vmatpush.xpose.msra.mxu0 0.0
  %1321 = vmatpush.xpose.msra.mxu0 0.0
  %1322 = vmatpush.xpose.msra.mxu0 0.0
  %1323 = vmatpush.xpose.msra.mxu0 0.0
  %1324 = vmatpush.xpose.msra.mxu0 0.0
  %1325 = vmatpush.xpose.msra.mxu0 0.0
  %1326 = vmatpush.xpose.msra.mxu0 0.0
  %1327 = vmatpush.xpose.msra.mxu0 0.0
  %1328 = vmatpush.xpose.msra.mxu0 0.0
  %1329 = vmatpush.xpose.msra.mxu0 0.0
  %1330 = vmatpush.xpose.msra.mxu0 0.0
  %1331 = vmatpush.xpose.msra.mxu0 0.0
  %1332 = vmatpush.xpose.msra.mxu0 %v1315
  %1333 = vmatmul.f32.gmra.mxu0 %v1313
  %v1334 = vpop.f32.mrf.mxu0
  %v1335 = vadd.f32 0.0, %v1334
  %1336 = vdwg.mxu0
  %1337 = vrot.lane.b32.xlu0 %v1178, 120
  %v1338 = vpop.permute.xlu0 %1337
  %1339 = vrot.lane.b32.xlu0 %v1175, 88
  %v1340 = vpop.permute.xlu0 %1339
  %v1341 = vsel %vm324, %v1338, 0
  %v1343 = vsel %vm324, %v1340, 0
  %1345 = vmatpush.xpose.msra.mxu0 0.0
  %1346 = vmatpush.xpose.msra.mxu0 0.0
  %1347 = vmatpush.xpose.msra.mxu0 0.0
  %1348 = vmatpush.xpose.msra.mxu0 0.0
  %1349 = vmatpush.xpose.msra.mxu0 0.0
  %1350 = vmatpush.xpose.msra.mxu0 0.0
  %1351 = vmatpush.xpose.msra.mxu0 0.0
  %1352 = vmatpush.xpose.msra.mxu0 0.0
  %1353 = vmatpush.xpose.msra.mxu0 0.0
  %1354 = vmatpush.xpose.msra.mxu0 0.0
  %1355 = vmatpush.xpose.msra.mxu0 0.0
  %1356 = vmatpush.xpose.msra.mxu0 0.0
  %1357 = vmatpush.xpose.msra.mxu0 0.0
  %1358 = vmatpush.xpose.msra.mxu0 0.0
  %1359 = vmatpush.xpose.msra.mxu0 0.0
  %1360 = vmatpush.xpose.msra.mxu0 %v1343
  %1361 = vmatmul.f32.gmra.mxu0 %v1341
  %v1362 = vpop.f32.mrf.mxu0
  %v1363 = vadd.f32 0.0, %v1362
  %1364 = vdwg.mxu0
  %v1365 = vsel %vm324, %v1335, -inf
  %1366 = vmax.xlane.f32.xlu0 %v1365
  %v1367 = vpop.xlane.xlu0 %1366
  %v1368 = vsel %vm324, %v1363, -inf
  %1369 = vmax.xlane.f32.xlu0 %v1368
  %v1370 = vpop.xlane.xlu0 %1369
  %v1371 = vsub.f32 %v1335, %v1367
  %v1372 = vsub.f32 %v1363, %v1370
  %v1373 = vmul.f32 %v1371, 1.442695
  %v1374 = vpow.pop %v1373
  %v1375 = vmul.f32 %v1372, 1.442695
  %v1376 = vpow.pop %v1375
  %v1377 = vsel %vm324, %v1374, 0.0
  %1378 = vadd.xlane.f32.xlu0 %v1377
  %v1379 = vpop.xlane.xlu0 %1378
  %v1380 = vsel %vm324, %v1376, 0.0
  %1381 = vadd.xlane.f32.xlu0 %v1380
  %v1382 = vpop.xlane.xlu0 %1381
  %v1383 = vrcp.pop %v1379
  %v1384 = vrcp.pop %v1382
  %v1385 = vmul.f32 %v1374, %v1383
  %v1386 = vmul.f32 %v1376, %v1384
  %1387 = vrot.lane.b32.xlu0 %v1173, 56
  %v1388 = vpop.permute.xlu0 %1387
  %v1391 = vsel %vm324, %v1385, 0
  %1393 = vmatpush.msra.mxu0 0.0
  %1394 = vmatpush.msra.mxu0 0.0
  %1395 = vmatpush.msra.mxu0 0.0
  %1396 = vmatpush.msra.mxu0 0.0
  %1397 = vmatpush.msra.mxu0 0.0
  %1398 = vmatpush.msra.mxu0 0.0
  %1399 = vmatpush.msra.mxu0 0.0
  %1400 = vmatpush.msra.mxu0 0.0
  %1401 = vmatpush.msra.mxu0 0.0
  %1402 = vmatpush.msra.mxu0 0.0
  %1403 = vmatpush.msra.mxu0 0.0
  %1404 = vmatpush.msra.mxu0 0.0
  %1405 = vmatpush.msra.mxu0 0.0
  %1406 = vmatpush.msra.mxu0 0.0
  %1407 = vmatpush.msra.mxu0 0.0
  %1408 = vmatpush.msra.mxu0 %v1388
  %1409 = vmatmul.f32.gmra.mxu0 %v1391
  %v1410 = vpop.f32.mrf.mxu0
  %v1411 = vadd.f32 0.0, %v1410
  %1412 = vdwg.mxu0
  %1413 = vrot.lane.b32.xlu0 %v1175, 56
  %v1414 = vpop.permute.xlu0 %1413
  %v1417 = vsel %vm324, %v1386, 0
  %1419 = vmatpush.msra.mxu0 0.0
  %1420 = vmatpush.msra.mxu0 0.0
  %1421 = vmatpush.msra.mxu0 0.0
  %1422 = vmatpush.msra.mxu0 0.0
  %1423 = vmatpush.msra.mxu0 0.0
  %1424 = vmatpush.msra.mxu0 0.0
  %1425 = vmatpush.msra.mxu0 0.0
  %1426 = vmatpush.msra.mxu0 0.0
  %1427 = vmatpush.msra.mxu0 0.0
  %1428 = vmatpush.msra.mxu0 0.0
  %1429 = vmatpush.msra.mxu0 0.0
  %1430 = vmatpush.msra.mxu0 0.0
  %1431 = vmatpush.msra.mxu0 0.0
  %1432 = vmatpush.msra.mxu0 0.0
  %1433 = vmatpush.msra.mxu0 0.0
  %1434 = vmatpush.msra.mxu0 %v1414
  %1435 = vmatmul.f32.gmra.mxu0 %v1417
  %v1436 = vpop.f32.mrf.mxu0
  %v1437 = vadd.f32 0.0, %v1436
  %1438 = vdwg.mxu0
  %1439 = vrot.lane.b32.xlu0 %v1177, 112
  %v1440 = vpop.permute.xlu0 %1439
  %1441 = vrot.lane.b32.xlu0 %v1173, 80
  %v1442 = vpop.permute.xlu0 %1441
  %v1443 = vsel %vm324, %v1440, 0
  %v1445 = vsel %vm324, %v1442, 0
  %1447 = vmatpush.xpose.msra.mxu0 0.0
  %1448 = vmatpush.xpose.msra.mxu0 0.0
  %1449 = vmatpush.xpose.msra.mxu0 0.0
  %1450 = vmatpush.xpose.msra.mxu0 0.0
  %1451 = vmatpush.xpose.msra.mxu0 0.0
  %1452 = vmatpush.xpose.msra.mxu0 0.0
  %1453 = vmatpush.xpose.msra.mxu0 0.0
  %1454 = vmatpush.xpose.msra.mxu0 0.0
  %1455 = vmatpush.xpose.msra.mxu0 0.0
  %1456 = vmatpush.xpose.msra.mxu0 0.0
  %1457 = vmatpush.xpose.msra.mxu0 0.0
  %1458 = vmatpush.xpose.msra.mxu0 0.0
  %1459 = vmatpush.xpose.msra.mxu0 0.0
  %1460 = vmatpush.xpose.msra.mxu0 0.0
  %1461 = vmatpush.xpose.msra.mxu0 0.0
  %1462 = vmatpush.xpose.msra.mxu0 %v1445
  %1463 = vmatmul.f32.gmra.mxu0 %v1443
  %v1464 = vpop.f32.mrf.mxu0
  %v1465 = vadd.f32 0.0, %v1464
  %1466 = vdwg.mxu0
  %1467 = vrot.lane.b32.xlu0 %v1178, 112
  %v1468 = vpop.permute.xlu0 %1467
  %1469 = vrot.lane.b32.xlu0 %v1175, 80
  %v1470 = vpop.permute.xlu0 %1469
  %v1471 = vsel %vm324, %v1468, 0
  %v1473 = vsel %vm324, %v1470, 0
  %1475 = vmatpush.xpose.msra.mxu0 0.0
  %1476 = vmatpush.xpose.msra.mxu0 0.0
  %1477 = vmatpush.xpose.msra.mxu0 0.0
  %1478 = vmatpush.xpose.msra.mxu0 0.0
  %1479 = vmatpush.xpose.msra.mxu0 0.0
  %1480 = vmatpush.xpose.msra.mxu0 0.0
  %1481 = vmatpush.xpose.msra.mxu0 0.0
  %1482 = vmatpush.xpose.msra.mxu0 0.0
  %1483 = vmatpush.xpose.msra.mxu0 0.0
  %1484 = vmatpush.xpose.msra.mxu0 0.0
  %1485 = vmatpush.xpose.msra.mxu0 0.0
  %1486 = vmatpush.xpose.msra.mxu0 0.0
  %1487 = vmatpush.xpose.msra.mxu0 0.0
  %1488 = vmatpush.xpose.msra.mxu0 0.0
  %1489 = vmatpush.xpose.msra.mxu0 0.0
  %1490 = vmatpush.xpose.msra.mxu0 %v1473
  %1491 = vmatmul.f32.gmra.mxu0 %v1471
  %v1492 = vpop.f32.mrf.mxu0
  %v1493 = vadd.f32 0.0, %v1492
  %1494 = vdwg.mxu0
  %v1495 = vsel %vm324, %v1465, -inf
  %1496 = vmax.xlane.f32.xlu0 %v1495
  %v1497 = vpop.xlane.xlu0 %1496
  %v1498 = vsel %vm324, %v1493, -inf
  %1499 = vmax.xlane.f32.xlu0 %v1498
  %v1500 = vpop.xlane.xlu0 %1499
  %v1501 = vsub.f32 %v1465, %v1497
  %v1502 = vsub.f32 %v1493, %v1500
  %v1503 = vmul.f32 %v1501, 1.442695
  %v1504 = vpow.pop %v1503
  %v1505 = vmul.f32 %v1502, 1.442695
  %v1506 = vpow.pop %v1505
  %v1507 = vsel %vm324, %v1504, 0.0
  %1508 = vadd.xlane.f32.xlu0 %v1507
  %v1509 = vpop.xlane.xlu0 %1508
  %v1510 = vsel %vm324, %v1506, 0.0
  %1511 = vadd.xlane.f32.xlu0 %v1510
  %v1512 = vpop.xlane.xlu0 %1511
  %v1513 = vrcp.pop %v1509
  %v1514 = vrcp.pop %v1512
  %v1515 = vmul.f32 %v1504, %v1513
  %v1516 = vmul.f32 %v1506, %v1514
  %1517 = vrot.lane.b32.xlu0 %v1173, 48
  %v1518 = vpop.permute.xlu0 %1517
  %v1521 = vsel %vm324, %v1515, 0
  %1523 = vmatpush.msra.mxu0 0.0
  %1524 = vmatpush.msra.mxu0 0.0
  %1525 = vmatpush.msra.mxu0 0.0
  %1526 = vmatpush.msra.mxu0 0.0
  %1527 = vmatpush.msra.mxu0 0.0
  %1528 = vmatpush.msra.mxu0 0.0
  %1529 = vmatpush.msra.mxu0 0.0
  %1530 = vmatpush.msra.mxu0 0.0
  %1531 = vmatpush.msra.mxu0 0.0
  %1532 = vmatpush.msra.mxu0 0.0
  %1533 = vmatpush.msra.mxu0 0.0
  %1534 = vmatpush.msra.mxu0 0.0
  %1535 = vmatpush.msra.mxu0 0.0
  %1536 = vmatpush.msra.mxu0 0.0
  %1537 = vmatpush.msra.mxu0 0.0
  %1538 = vmatpush.msra.mxu0 %v1518
  %1539 = vmatmul.f32.gmra.mxu0 %v1521
  %v1540 = vpop.f32.mrf.mxu0
  %v1541 = vadd.f32 0.0, %v1540
  %1542 = vdwg.mxu0
  %1543 = vrot.lane.b32.xlu0 %v1175, 48
  %v1544 = vpop.permute.xlu0 %1543
  %v1547 = vsel %vm324, %v1516, 0
  %1549 = vmatpush.msra.mxu0 0.0
  %1550 = vmatpush.msra.mxu0 0.0
  %1551 = vmatpush.msra.mxu0 0.0
  %1552 = vmatpush.msra.mxu0 0.0
  %1553 = vmatpush.msra.mxu0 0.0
  %1554 = vmatpush.msra.mxu0 0.0
  %1555 = vmatpush.msra.mxu0 0.0
  %1556 = vmatpush.msra.mxu0 0.0
  %1557 = vmatpush.msra.mxu0 0.0
  %1558 = vmatpush.msra.mxu0 0.0
  %1559 = vmatpush.msra.mxu0 0.0
  %1560 = vmatpush.msra.mxu0 0.0
  %1561 = vmatpush.msra.mxu0 0.0
  %1562 = vmatpush.msra.mxu0 0.0
  %1563 = vmatpush.msra.mxu0 0.0
  %1564 = vmatpush.msra.mxu0 %v1544
  %1565 = vmatmul.f32.gmra.mxu0 %v1547
  %v1566 = vpop.f32.mrf.mxu0
  %v1567 = vadd.f32 0.0, %v1566
  %1568 = vdwg.mxu0
  %1569 = vrot.lane.b32.xlu0 %v1177, 104
  %v1570 = vpop.permute.xlu0 %1569
  %1571 = vrot.lane.b32.xlu0 %v1173, 72
  %v1572 = vpop.permute.xlu0 %1571
  %v1573 = vsel %vm324, %v1570, 0
  %v1575 = vsel %vm324, %v1572, 0
  %1577 = vmatpush.xpose.msra.mxu0 0.0
  %1578 = vmatpush.xpose.msra.mxu0 0.0
  %1579 = vmatpush.xpose.msra.mxu0 0.0
  %1580 = vmatpush.xpose.msra.mxu0 0.0
  %1581 = vmatpush.xpose.msra.mxu0 0.0
  %1582 = vmatpush.xpose.msra.mxu0 0.0
  %1583 = vmatpush.xpose.msra.mxu0 0.0
  %1584 = vmatpush.xpose.msra.mxu0 0.0
  %1585 = vmatpush.xpose.msra.mxu0 0.0
  %1586 = vmatpush.xpose.msra.mxu0 0.0
  %1587 = vmatpush.xpose.msra.mxu0 0.0
  %1588 = vmatpush.xpose.msra.mxu0 0.0
  %1589 = vmatpush.xpose.msra.mxu0 0.0
  %1590 = vmatpush.xpose.msra.mxu0 0.0
  %1591 = vmatpush.xpose.msra.mxu0 0.0
  %1592 = vmatpush.xpose.msra.mxu0 %v1575
  %1593 = vmatmul.f32.gmra.mxu0 %v1573
  %v1594 = vpop.f32.mrf.mxu0
  %v1595 = vadd.f32 0.0, %v1594
  %1596 = vdwg.mxu0
  %1597 = vrot.lane.b32.xlu0 %v1178, 104
  %v1598 = vpop.permute.xlu0 %1597
  %1599 = vrot.lane.b32.xlu0 %v1175, 72
  %v1600 = vpop.permute.xlu0 %1599
  %v1601 = vsel %vm324, %v1598, 0
  %v1603 = vsel %vm324, %v1600, 0
  %1605 = vmatpush.xpose.msra.mxu0 0.0
  %1606 = vmatpush.xpose.msra.mxu0 0.0
  %1607 = vmatpush.xpose.msra.mxu0 0.0
  %1608 = vmatpush.xpose.msra.mxu0 0.0
  %1609 = vmatpush.xpose.msra.mxu0 0.0
  %1610 = vmatpush.xpose.msra.mxu0 0.0
  %1611 = vmatpush.xpose.msra.mxu0 0.0
  %1612 = vmatpush.xpose.msra.mxu0 0.0
  %1613 = vmatpush.xpose.msra.mxu0 0.0
  %1614 = vmatpush.xpose.msra.mxu0 0.0
  %1615 = vmatpush.xpose.msra.mxu0 0.0
  %1616 = vmatpush.xpose.msra.mxu0 0.0
  %1617 = vmatpush.xpose.msra.mxu0 0.0
  %1618 = vmatpush.xpose.msra.mxu0 0.0
  %1619 = vmatpush.xpose.msra.mxu0 0.0
  %1620 = vmatpush.xpose.msra.mxu0 %v1603
  %1621 = vmatmul.f32.gmra.mxu0 %v1601
  %v1622 = vpop.f32.mrf.mxu0
  %v1623 = vadd.f32 0.0, %v1622
  %1624 = vdwg.mxu0
  %v1625 = vsel %vm324, %v1595, -inf
  %1626 = vmax.xlane.f32.xlu0 %v1625
  %v1627 = vpop.xlane.xlu0 %1626
  %v1628 = vsel %vm324, %v1623, -inf
  %1629 = vmax.xlane.f32.xlu0 %v1628
  %v1630 = vpop.xlane.xlu0 %1629
  %v1631 = vsub.f32 %v1595, %v1627
  %v1632 = vsub.f32 %v1623, %v1630
  %v1633 = vmul.f32 %v1631, 1.442695
  %v1634 = vpow.pop %v1633
  %v1635 = vmul.f32 %v1632, 1.442695
  %v1636 = vpow.pop %v1635
  %v1637 = vsel %vm324, %v1634, 0.0
  %1638 = vadd.xlane.f32.xlu0 %v1637
  %v1639 = vpop.xlane.xlu0 %1638
  %v1640 = vsel %vm324, %v1636, 0.0
  %1641 = vadd.xlane.f32.xlu0 %v1640
  %v1642 = vpop.xlane.xlu0 %1641
  %v1643 = vrcp.pop %v1639
  %v1644 = vrcp.pop %v1642
  %v1645 = vmul.f32 %v1634, %v1643
  %v1646 = vmul.f32 %v1636, %v1644
  %1647 = vrot.lane.b32.xlu0 %v1173, 40
  %v1648 = vpop.permute.xlu0 %1647
  %v1651 = vsel %vm324, %v1645, 0
  %1653 = vmatpush.msra.mxu0 0.0
  %1654 = vmatpush.msra.mxu0 0.0
  %1655 = vmatpush.msra.mxu0 0.0
  %1656 = vmatpush.msra.mxu0 0.0
  %1657 = vmatpush.msra.mxu0 0.0
  %1658 = vmatpush.msra.mxu0 0.0
  %1659 = vmatpush.msra.mxu0 0.0
  %1660 = vmatpush.msra.mxu0 0.0
  %1661 = vmatpush.msra.mxu0 0.0
  %1662 = vmatpush.msra.mxu0 0.0
  %1663 = vmatpush.msra.mxu0 0.0
  %1664 = vmatpush.msra.mxu0 0.0
  %1665 = vmatpush.msra.mxu0 0.0
  %1666 = vmatpush.msra.mxu0 0.0
  %1667 = vmatpush.msra.mxu0 0.0
  %1668 = vmatpush.msra.mxu0 %v1648
  %1669 = vmatmul.f32.gmra.mxu0 %v1651
  %v1670 = vpop.f32.mrf.mxu0
  %v1671 = vadd.f32 0.0, %v1670
  %1672 = vdwg.mxu0
  %1673 = vrot.lane.b32.xlu0 %v1175, 40
  %v1674 = vpop.permute.xlu0 %1673
  %v1677 = vsel %vm324, %v1646, 0
  %1679 = vmatpush.msra.mxu0 0.0
  %1680 = vmatpush.msra.mxu0 0.0
  %1681 = vmatpush.msra.mxu0 0.0
  %1682 = vmatpush.msra.mxu0 0.0
  %1683 = vmatpush.msra.mxu0 0.0
  %1684 = vmatpush.msra.mxu0 0.0
  %1685 = vmatpush.msra.mxu0 0.0
  %1686 = vmatpush.msra.mxu0 0.0
  %1687 = vmatpush.msra.mxu0 0.0
  %1688 = vmatpush.msra.mxu0 0.0
  %1689 = vmatpush.msra.mxu0 0.0
  %1690 = vmatpush.msra.mxu0 0.0
  %1691 = vmatpush.msra.mxu0 0.0
  %1692 = vmatpush.msra.mxu0 0.0
  %1693 = vmatpush.msra.mxu0 0.0
  %1694 = vmatpush.msra.mxu0 %v1674
  %1695 = vmatmul.f32.gmra.mxu0 %v1677
  %v1696 = vpop.f32.mrf.mxu0
  %v1697 = vadd.f32 0.0, %v1696
  %1698 = vdwg.mxu0
  %1701 = vrot.lane.b32.xlu0 %v1411, 8
  %v1702 = vpop.permute.xlu0 %1701
  %1703 = vrot.lane.b32.xlu0 %v1437, 8
  %v1704 = vpop.permute.xlu0 %1703
  %1709 = vrot.lane.b32.xlu0 %v1541, 16
  %v1710 = vpop.permute.xlu0 %1709
  %1711 = vrot.lane.b32.xlu0 %v1567, 16
  %v1712 = vpop.permute.xlu0 %1711
  %1717 = vrot.lane.b32.xlu0 %v1671, 24
  %v1718 = vpop.permute.xlu0 %1717
  %1719 = vrot.lane.b32.xlu0 %v1697, 24
  %v1720 = vpop.permute.xlu0 %1719
  %v1723 = vsel %vm324, %v1281, %v1702
  %v1724 = vsel %vm324, %v1307, %v1704
  %v1725 = vsel %vm868, %v1723, %v1710
  %v1726 = vsel %vm868, %v1724, %v1712
  %v1727 = vsel %vm871, %v1725, %v1718
  %v1728 = vsel %vm871, %v1726, %v1720
  %v1729 = vpack.c.bf16 %v1728, %v1727
  %v1730 = vld [vmem:[%s41] sm:$0xf]
  %v1731 = vld [vmem:[%s41 + $0x4] sm:$0xf]
  %v1732 = vld [vmem:[%s41 + $0x8] sm:$0xf]
  %v1733 = vld [vmem:[%s41 + $0xc] sm:$0xf]
  %v1734 = vld [vmem:[%s43] sm:$0x1]
  %v1736 = vperm.slane %v1734, 0
  %v1742 = vunpack.c.l.b16 %v1730
  %v1743 = vunpack.c.l.b16 %v1731
  %v1744 = vunpack.c.l.b16 %v1732
  %v1745 = vunpack.c.l.b16 %v1733
  %v1746 = vpack.c.b16 %v1743, %v1742
  %v1747 = vpack.c.b16 %v1745, %v1744
  %v1751 = vsel %vm219, %v1729, 0
  %1753 = vmatpush.bf16.msra.mxu0 0
  %1754 = vmatpush.bf16.msra.mxu0 0
  %1755 = vmatpush.bf16.msra.mxu0 0
  %1756 = vmatpush.bf16.msra.mxu0 0
  %1757 = vmatpush.bf16.msra.mxu0 0
  %1758 = vmatpush.bf16.msra.mxu0 0
  %1759 = vmatpush.bf16.msra.mxu0 %v1747
  %1760 = vmatpush.bf16.msra.mxu0 %v1746
  %1761 = vmatmul.bf16.gmra.mxu0 %v1751
  %v1762 = vpop.f32.mrf.mxu0
  %v1763 = vadd.f32 %v1736, %v1762
  %v1764 = vpop.f32.mrf.mxu0
  %v1765 = vadd.f32 %v1736, %v1764
  %1766 = vdwg.mxu0
  %v1767 = vadd.f32 %v1763, %v1137
  %v1768 = vadd.f32 %v1765, %v1138
  %v1769 = vld [vmem:[%s45] sm:$0x1]
  %v1770 = vld [vmem:[%s47] sm:$0x1]
  %v1771 = vsel %vm219, %v1767, 0.0
  %1772 = vadd.xlane.f32.xlu0 %v1771
  %v1773 = vpop.xlane.xlu0 %1772
  %v1774 = vsel %vm219, %v1768, 0.0
  %1775 = vadd.xlane.f32.xlu0 %v1774
  %v1776 = vpop.xlane.xlu0 %1775
  %v1777 = vmul.f32 %v1773, %v232
  %v1778 = vmul.f32 %v1776, %v232
  %v1779 = vsub.f32 %v1767, %v1777
  %v1780 = vsub.f32 %v1768, %v1778
  %v1781 = vmul.f32 %v1779, %v1779
  %v1782 = vmul.f32 %v1780, %v1780
  %v1783 = vsel %vm219, %v1781, 0.0
  %1784 = vadd.xlane.f32.xlu0 %v1783
  %v1785 = vpop.xlane.xlu0 %1784
  %v1786 = vsel %vm219, %v1782, 0.0
  %1787 = vadd.xlane.f32.xlu0 %v1786
  %v1788 = vpop.xlane.xlu0 %1787
  %v1789 = vmul.f32 %v1785, %v232
  %v1790 = vmul.f32 %v1788, %v232
  %v1791 = vadd.f32 %v1789, 1e-12
  %v1792 = vadd.f32 %v1790, 1e-12
  %v1793 = vrsqrt.pop %v1791
  %v1794 = vmul.f32 %v1793, %v1791
  %v1795 = vmul.f32 %v1794, %v1793
  %v1796 = vmul.f32 0.5, %v1795
  %v1797 = vsub.f32 1.5, %v1796
  %v1798 = vmul.f32 %v1793, %v1797
  %vm1799 = vweird.f32 %v1791
  %vm1800 = vweird.f32 %v1793
  %vm1801 = vmor %vm1799, %vm1800
  %v1802 = vsel %vm1801, %v1793, %v1798
  %v1803 = vrsqrt.pop %v1792
  %v1804 = vmul.f32 %v1803, %v1792
  %v1805 = vmul.f32 %v1804, %v1803
  %v1806 = vmul.f32 0.5, %v1805
  %v1807 = vsub.f32 1.5, %v1806
  %v1808 = vmul.f32 %v1803, %v1807
  %vm1809 = vweird.f32 %v1792
  %vm1810 = vweird.f32 %v1803
  %vm1811 = vmor %vm1809, %vm1810
  %v1812 = vsel %vm1811, %v1803, %v1808
  %v1813 = vmul.f32 %v1779, %v1802
  %v1814 = vmul.f32 %v1780, %v1812
  %v1816 = vperm.slane %v1769, 0
  %v1818 = vmul.f32 %v1813, %v1816
  %v1819 = vmul.f32 %v1814, %v1816
  %v1821 = vperm.slane %v1770, 0
  %v1823 = vadd.f32 %v1818, %v1821
  %v1824 = vadd.f32 %v1819, %v1821
  %v1825 = vpack.c.bf16 %v1824, %v1823
  %v1826 = vld [vmem:[%s49] sm:$0xf]
  %v1827 = vld [vmem:[%s49 + $0x4] sm:$0xf]
  %v1828 = vld [vmem:[%s49 + $0x8] sm:$0xf]
  %v1829 = vld [vmem:[%s49 + $0xc] sm:$0xf]
  %v1830 = vld [vmem:[%s51] sm:$0x1]
  %v1832 = vperm.slane %v1830, 0
  %v1838 = vunpack.c.l.b16 %v1826
  %v1839 = vunpack.c.l.b16 %v1827
  %v1840 = vunpack.c.l.b16 %v1828
  %v1841 = vunpack.c.l.b16 %v1829
  %v1842 = vpack.c.b16 %v1839, %v1838
  %v1843 = vpack.c.b16 %v1841, %v1840
  %v1847 = vsel %vm219, %v1825, 0
  %1849 = vmatpush.bf16.msra.mxu0 0
  %1850 = vmatpush.bf16.msra.mxu0 0
  %1851 = vmatpush.bf16.msra.mxu0 0
  %1852 = vmatpush.bf16.msra.mxu0 0
  %1853 = vmatpush.bf16.msra.mxu0 0
  %1854 = vmatpush.bf16.msra.mxu0 0
  %1855 = vmatpush.bf16.msra.mxu0 %v1843
  %1856 = vmatpush.bf16.msra.mxu0 %v1842
  %1857 = vmatmul.bf16.gmra.mxu0 %v1847
  %v1858 = vpop.f32.mrf.mxu0
  %v1859 = vadd.f32 %v1832, %v1858
  %v1860 = vpop.f32.mrf.mxu0
  %v1861 = vadd.f32 %v1832, %v1860
  %1862 = vdwg.mxu0
  %v1863 = vmul.f32 %v1859, 0.5
  %v1864 = vmul.f32 %v1861, 0.5
  %v1865 = vmul.f32 %v1859, 0.044715
  %v1866 = vmul.f32 %v1861, 0.044715
  %v1867 = vmul.f32 %v1865, %v1859
  %v1868 = vmul.f32 %v1866, %v1861
  %v1869 = vmul.f32 %v1867, %v1859
  %v1870 = vmul.f32 %v1868, %v1861
  %v1871 = vadd.f32 %v1859, %v1869
  %v1872 = vadd.f32 %v1861, %v1870
  %v1873 = vmul.f32 %v1871, 0.7978846
  %v1874 = vmul.f32 %v1872, 0.7978846
  %v1875 = vtanh.pop %v1873
  %v1876 = vtanh.pop %v1874
  %v1877 = vadd.f32 %v1875, 1.0
  %v1878 = vadd.f32 %v1876, 1.0
  %v1879 = vmul.f32 %v1863, %v1877
  %v1880 = vmul.f32 %v1864, %v1878
  %v1881 = vpack.c.bf16 %v1880, %v1879
  %v1882 = vld [vmem:[%s53] sm:$0xf]
  %v1883 = vld [vmem:[%s53 + $0x4] sm:$0xf]
  %v1884 = vld [vmem:[%s53 + $0x8] sm:$0xf]
  %v1885 = vld [vmem:[%s53 + $0xc] sm:$0xf]
  %v1886 = vld [vmem:[%s53 + $0x10] sm:$0xf]
  %v1887 = vld [vmem:[%s53 + $0x14] sm:$0xf]
  %v1888 = vld [vmem:[%s53 + $0x18] sm:$0xf]
  %v1889 = vld [vmem:[%s53 + $0x1c] sm:$0xf]
  %v1890 = vld [vmem:[%s55] sm:$0x1]
  %v1892 = vperm.slane %v1890, 0
  %v1902 = vunpack.c.l.b16 %v1882
  %v1903 = vunpack.c.l.b16 %v1883
  %v1904 = vunpack.c.l.b16 %v1884
  %v1905 = vunpack.c.l.b16 %v1885
  %v1906 = vunpack.c.l.b16 %v1886
  %v1907 = vunpack.c.l.b16 %v1887
  %v1908 = vunpack.c.l.b16 %v1888
  %v1909 = vunpack.c.l.b16 %v1889
  %v1910 = vpack.c.b16 %v1903, %v1902
  %v1911 = vpack.c.b16 %v1905, %v1904
  %v1912 = vpack.c.b16 %v1907, %v1906
  %v1913 = vpack.c.b16 %v1909, %v1908
  %v1919 = vsel %vm1063, %v1881, 0
  %1921 = vmatpush.bf16.msra.mxu0 0
  %1922 = vmatpush.bf16.msra.mxu0 0
  %1923 = vmatpush.bf16.msra.mxu0 0
  %1924 = vmatpush.bf16.msra.mxu0 0
  %1925 = vmatpush.bf16.msra.mxu0 %v1913
  %1926 = vmatpush.bf16.msra.mxu0 %v1912
  %1927 = vmatpush.bf16.msra.mxu0 %v1911
  %1928 = vmatpush.bf16.msra.mxu0 %v1910
  %1929 = vmatmul.bf16.gmra.mxu0 %v1919
  %v1930 = vpop.f32.mrf.mxu0
  %v1931 = vadd.f32 %v1892, %v1930
  %v1932 = vpop.f32.mrf.mxu0
  %v1933 = vadd.f32 %v1892, %v1932
  %1934 = vdwg.mxu0
  %v1935 = vadd.f32 %v1931, %v1823
  %v1936 = vadd.f32 %v1933, %v1824
  %v1937 = vld [vmem:[%s57] sm:$0x1]
  %v1938 = vld [vmem:[%s59] sm:$0x1]
  %v1939 = vsel %vm219, %v1935, 0.0
  %1940 = vadd.xlane.f32.xlu0 %v1939
  %v1941 = vpop.xlane.xlu0 %1940
  %v1942 = vsel %vm219, %v1936, 0.0
  %1943 = vadd.xlane.f32.xlu0 %v1942
  %v1944 = vpop.xlane.xlu0 %1943
  %v1945 = vmul.f32 %v1941, %v232
  %v1946 = vmul.f32 %v1944, %v232
  %v1947 = vsub.f32 %v1935, %v1945
  %v1948 = vsub.f32 %v1936, %v1946
  %v1949 = vmul.f32 %v1947, %v1947
  %v1950 = vmul.f32 %v1948, %v1948
  %v1951 = vsel %vm219, %v1949, 0.0
  %1952 = vadd.xlane.f32.xlu0 %v1951
  %v1953 = vpop.xlane.xlu0 %1952
  %v1954 = vsel %vm219, %v1950, 0.0
  %1955 = vadd.xlane.f32.xlu0 %v1954
  %v1956 = vpop.xlane.xlu0 %1955
  %v1957 = vmul.f32 %v1953, %v232
  %v1958 = vmul.f32 %v1956, %v232
  %v1959 = vadd.f32 %v1957, 1e-12
  %v1960 = vadd.f32 %v1958, 1e-12
  %v1961 = vrsqrt.pop %v1959
  %v1962 = vmul.f32 %v1961, %v1959
  %v1963 = vmul.f32 %v1962, %v1961
  %v1964 = vmul.f32 0.5, %v1963
  %v1965 = vsub.f32 1.5, %v1964
  %v1966 = vmul.f32 %v1961, %v1965
  %vm1967 = vweird.f32 %v1959
  %vm1968 = vweird.f32 %v1961
  %vm1969 = vmor %vm1967, %vm1968
  %v1970 = vsel %vm1969, %v1961, %v1966
  %v1971 = vrsqrt.pop %v1960
  %v1972 = vmul.f32 %v1971, %v1960
  %v1973 = vmul.f32 %v1972, %v1971
  %v1974 = vmul.f32 0.5, %v1973
  %v1975 = vsub.f32 1.5, %v1974
  %v1976 = vmul.f32 %v1971, %v1975
  %vm1977 = vweird.f32 %v1960
  %vm1978 = vweird.f32 %v1971
  %vm1979 = vmor %vm1977, %vm1978
  %v1980 = vsel %vm1979, %v1971, %v1976
  %v1981 = vmul.f32 %v1947, %v1970
  %v1982 = vmul.f32 %v1948, %v1980
  %v1984 = vperm.slane %v1937, 0
  %v1986 = vmul.f32 %v1981, %v1984
  %v1987 = vmul.f32 %v1982, %v1984
  %v1989 = vperm.slane %v1938, 0
  %v1991 = vadd.f32 %v1986, %v1989
  %v1992 = vadd.f32 %v1987, %v1989
  %v1993 = vpack.c.bf16 %v1992, %v1991
  %v1994 = vld [vmem:[%s61] sm:$0xf]
  %v1995 = vld [vmem:[%s61 + $0x4] sm:$0xf]
  %v1996 = vld [vmem:[%s61 + $0x8] sm:$0xf]
  %v1997 = vld [vmem:[%s61 + $0xc] sm:$0xf]
  %v1998 = vld [vmem:[%s63] sm:$0x1]
  %v2000 = vperm.slane %v1998, 0
  %v2006 = vunpack.c.l.b16 %v1994
  %v2007 = vunpack.c.l.b16 %v1995
  %v2008 = vunpack.c.l.b16 %v1996
  %v2009 = vunpack.c.l.b16 %v1997
  %v2010 = vpack.c.b16 %v2007, %v2006
  %v2011 = vpack.c.b16 %v2009, %v2008
  %v2015 = vsel %vm219, %v1993, 0
  %2017 = vmatpush.bf16.msra.mxu0 0
  %2018 = vmatpush.bf16.msra.mxu0 0
  %2019 = vmatpush.bf16.msra.mxu0 0
  %2020 = vmatpush.bf16.msra.mxu0 0
  %2021 = vmatpush.bf16.msra.mxu0 0
  %2022 = vmatpush.bf16.msra.mxu0 0
  %2023 = vmatpush.bf16.msra.mxu0 %v2011
  %2024 = vmatpush.bf16.msra.mxu0 %v2010
  %2025 = vmatmul.bf16.gmra.mxu0 %v2015
  %v2026 = vpop.f32.mrf.mxu0
  %v2027 = vadd.f32 %v2000, %v2026
  %v2028 = vpop.f32.mrf.mxu0
  %v2029 = vadd.f32 %v2000, %v2028
  %2030 = vdwg.mxu0
  %2031 = vst [vmem:[%s65] sm:$0xff] %v2027
  %2032 = vst [vmem:[%s65 + $0x8] sm:$0xff] %v2029
  // Predicated region
  $region130: #{bert_softmax_forward.1} parent=0 // pred_check
    _
  $region131: #{bert_softmax_forward.1} parent=0 // pred_check_branch
    %2034 = sbr.rel (0) target = $region133
  $region132: #{bert_softmax_forward.1} parent=0 // pred_region
    _
  $region133: #{bert_softmax_forward.1} parent=0 // pred_fallthru
    _
  // Predicated region
  $region134: #{bert_softmax_forward.1} parent=0 // pred_check
    _
  $region135: #{bert_softmax_forward.1} parent=0 // pred_check_branch
    %2036 = sbr.rel (0) target = $region137
  $region136: #{bert_softmax_forward.1} parent=0 // pred_region
    _
  $region137: #{bert_softmax_forward.1} parent=0 // pred_fallthru
    _

</llo_original>
